<compile_context>
chip_gen: v5e
topology: v5e:2x2
jax: 0.10.0
libtpu: 0.0.40
codegen_flags: <defaults>
</compile_context>

<pallas_src>
from functools import partial

import numpy as np
import jax
import jax.numpy as jnp
from jax import lax
from jax.experimental import pallas as pl
from jax.experimental.pallas import tpu as pltpu


# ---------------------------------------------------------------------------
# Kernel
# ---------------------------------------------------------------------------
def _lstm_pool_kernel(xf_ref, xr_ref, len_ref,
                      wih_f_ref, whh_f_ref, b_f_ref,
                      wih_r_ref, whh_r_ref, b_r_ref,
                      out_ref,
                      gxf_s, gxr_s,
                      hf_s, cf_s, hr_s, cr_s, accf_s, accr_s,
                      *, t_real):
    """One (batch-block, time-chunk) grid step of the bi-LSTM + mean pool."""
    Tc, BB, E = xf_ref.shape
    H = whh_f_ref.shape[0]          # hidden size (gates packed with stride H)
    G = whh_f_ref.shape[1]          # round_up(4*H, 128)

    tc = pl.program_id(1)
    nT = pl.num_programs(1)

    # ---- init resident state at the first time chunk of this batch block ----
    @pl.when(tc == 0)
    def _init():
        hf_s[...] = jnp.zeros_like(hf_s)
        cf_s[...] = jnp.zeros_like(cf_s)
        hr_s[...] = jnp.zeros_like(hr_s)
        cr_s[...] = jnp.zeros_like(cr_s)
        accf_s[...] = jnp.zeros_like(accf_s)
        accr_s[...] = jnp.zeros_like(accr_s)

    # ---- bulk input projection for this chunk (off the serial path) --------
    # One big bf16 MXU matmul per direction: (Tc*BB, E) x (E, G), f32 accumulate,
    # bias folded in; stored to VMEM scratch consumed by the recurrence.
    xf2 = xf_ref[...].reshape(Tc * BB, E)
    xr2 = xr_ref[...].reshape(Tc * BB, E)
    gxf = jnp.dot(xf2, wih_f_ref[...], preferred_element_type=jnp.float32) + b_f_ref[...]
    gxr = jnp.dot(xr2, wih_r_ref[...], preferred_element_type=jnp.float32) + b_r_ref[...]
    gxf_s[...] = gxf.reshape(Tc, BB, G)
    gxr_s[...] = gxr.reshape(Tc, BB, G)

    len_vec = len_ref[...]                       # (BB, 1) f32 valid-token counts

    def _sigmoid(x):                             # 1 tanh instead of exp+recip
        return 0.5 * jnp.tanh(0.5 * x) + 0.5

    def _cell(gx, h, c, whh_ref):
        # recurrence only carries the (BB,H) x (H,G) dot; operands bf16, acc f32
        gates = gx + jnp.dot(h.astype(jnp.bfloat16), whh_ref[...],
                             preferred_element_type=jnp.float32)
        i = _sigmoid(gates[:, 0:H])
        f = _sigmoid(gates[:, H:2 * H])
        g = jnp.tanh(gates[:, 2 * H:3 * H])
        o = _sigmoid(gates[:, 3 * H:4 * H])
        c_new = f * c + i * g
        h_new = o * jnp.tanh(c_new)
        return h_new, c_new

    def body(j, carry):
        hf, cf, hr, cr, accf, accr = carry
        # forward direction: global time = tc*Tc + j (padded tail is harmless)
        hf, cf = _cell(gxf_s[j], hf, cf, whh_f_ref)
        gf = tc * Tc + j
        accf = accf + jnp.where(len_vec > gf.astype(jnp.float32), hf, 0.0)
        # reverse direction: global time = (nT-1-tc)*Tc + (Tc-1-j)
        jr = Tc - 1 - j
        hr_new, cr_new = _cell(gxr_s[jr], hr, cr, whh_r_ref)
        gr = (nT - 1 - tc) * Tc + jr
        valid_r = gr < t_real                    # skip padded steps t >= T:
        hr = jnp.where(valid_r, hr_new, hr)      # reverse pass starts at t=T-1
        cr = jnp.where(valid_r, cr_new, cr)
        accr = accr + jnp.where(len_vec > gr.astype(jnp.float32), hr, 0.0)
        return hf, cf, hr, cr, accf, accr

    init = (hf_s[...], cf_s[...], hr_s[...], cr_s[...], accf_s[...], accr_s[...])
    unroll = 2 if BB >= 128 else min(4, Tc)      # bound vreg pressure at large BB
    hf, cf, hr, cr, accf, accr = lax.fori_loop(0, Tc, body, init, unroll=unroll)

    hf_s[...] = hf
    cf_s[...] = cf
    hr_s[...] = hr
    cr_s[...] = cr
    accf_s[...] = accf
    accr_s[...] = accr

    # ---- finalize: masked mean (exact division), direct slab stores ---------
    @pl.when(tc == nT - 1)
    def _finalize():
        cnt = jnp.maximum(len_vec, 1.0)          # (BB,1)
        out_ref[:, 0:H] = accf / cnt
        out_ref[:, H:2 * H] = accr / cnt


# ---------------------------------------------------------------------------
# Parameter init (mimics nn.LSTM's U(-1/sqrt(H), 1/sqrt(H)); PyTorch layout)
# ---------------------------------------------------------------------------
def init_params(embed_size: int, hidden_size: int, key) -> dict:
    H, E = hidden_size, embed_size
    std = 1.0 / np.sqrt(H)
    ks = jax.random.split(key, 8)
    u = lambda k, shp: jax.random.uniform(k, shp, jnp.float32, -std, std)
    return {
        "w_ih_f": u(ks[0], (4 * H, E)), "w_hh_f": u(ks[1], (4 * H, H)),
        "b_ih_f": u(ks[2], (4 * H,)),  "b_hh_f": u(ks[3], (4 * H,)),
        "w_ih_r": u(ks[4], (4 * H, E)), "w_hh_r": u(ks[5], (4 * H, H)),
        "b_ih_r": u(ks[6], (4 * H,)),  "b_hh_r": u(ks[7], (4 * H,)),
    }
# TODO(synk): PyTorch's seed_everything(42)-seeded nn.LSTM weights are not
# reproducible here; kernel-equivalent random weights are drawn with JAX RNG.


def _round_up(x, m):
    return (x + m - 1) // m * m


def _default_batch_block_cap():
    """256 on 256-wide MXU chips (v6e/v7x), 128 on v5e/older."""
    try:
        kind = jax.devices()[0].device_kind.lower()
        if "v5 lite" in kind or "v5e" in kind or "v4" in kind or "v3" in kind:
            return 128
        return 256
    except Exception:
        return 128


def _vmem_bytes(Tc, BB, E, H, G):
    """Rough per-core VMEM working-set estimate (lane-padded, double-buffered)."""
    e_pad = _round_up(E, 128)
    x_buf = 2 * 2 * Tc * BB * e_pad * 2              # fwd+rev views, 2 bufs, bf16
    gx = 2 * Tc * BB * G * 4                         # gx scratch, f32
    w = 2 * 2 * ((E + H) * G * 2 + G * 4)            # weights bf16 + bias f32
    st = 6 * BB * max(_round_up(H, 128), 128) * 4    # h/c/acc state
    out = 2 * BB * _round_up(2 * H, 128) * 4
    return x_buf + gx + w + st + out


def _pack_params(p, E, H, G):
    """Pack PyTorch-layout weights: gates contiguous with stride H, 4H padded to G."""
    def pack_w(w, din):
        out = np.zeros((din, G), np.float32)
        wn = np.asarray(w, np.float32)
        for k in range(4):
            out[:, k * H:(k + 1) * H] = wn[k * H:(k + 1) * H, :].T
        return jnp.asarray(out, jnp.bfloat16)

    def pack_b(b_ih, b_hh):
        out = np.zeros((1, G), np.float32)
        out[0, :4 * H] = np.asarray(b_ih, np.float32) + np.asarray(b_hh, np.float32)
        return jnp.asarray(out)                      # bias stays f32

    return {
        "wih_f": pack_w(p["w_ih_f"], E), "whh_f": pack_w(p["w_hh_f"], H),
        "b_f": pack_b(p["b_ih_f"], p["b_hh_f"]),
        "wih_r": pack_w(p["w_ih_r"], E), "whh_r": pack_w(p["w_hh_r"], H),
        "b_r": pack_b(p["b_ih_r"], p["b_hh_r"]),
    }


# ---------------------------------------------------------------------------
# Wrapper (= RandomLSTM.forward with mean pooling)
# ---------------------------------------------------------------------------
def random_lstm_forward(text, length, params, *, time_chunk=32, batch_block_cap=None):
    B, T, E = text.shape
    H = params["w_hh_f"].shape[1]
    G = _round_up(4 * H, 128)                    # packed gate width

    if batch_block_cap is None:
        batch_block_cap = _default_batch_block_cap()
    BB = min(_round_up(B, 8), batch_block_cap)   # batch block (sublane multiple)
    Bp = _round_up(B, BB)
    nB = Bp // BB

    # Pick the time chunk, shrinking until the working set fits ~48 MiB
    # (headroom against v7x's 64 MiB physical VMEM); pad T up to a multiple.
    Tc = max(1, min(time_chunk, T))
    while Tc > 8 and _vmem_bytes(Tc, BB, E, H, G) > 48 * 2**20:
        Tc = max(8, Tc // 2)
    Tp = _round_up(T, Tc)
    nT = Tp // Tc

    packed = _pack_params(params, E, H, G)

    # bf16 inputs, natural E (no E-padding shipped over HBM), time-major layout
    x = jnp.zeros((Bp, Tp, E), jnp.bfloat16).at[:B, :T, :].set(text.astype(jnp.bfloat16))
    x_tm = jnp.transpose(x, (1, 0, 2))           # (Tp, Bp, E)
    len_vec = jnp.zeros((Bp, 1), jnp.float32).at[:B, 0].set(
        jnp.clip(length, 0, T).astype(jnp.float32))

    vmem_limit = int(max(32 * 2**20, min(64 * 2**20,
                                         _vmem_bytes(Tc, BB, E, H, G) + 8 * 2**20)))

    kernel = pl.pallas_call(
        partial(_lstm_pool_kernel, t_real=T),
        out_shape=jax.ShapeDtypeStruct((Bp, 2 * H), jnp.float32),
        grid_spec=pltpu.PrefetchScalarGridSpec(
            num_scalar_prefetch=0,
            grid=(nB, nT),
            in_specs=[
                # x, forward time order
                pl.BlockSpec((Tc, BB, E), lambda b, tc: (tc, b, 0)),
                # x, reverse-chunk order (for the backward direction)
                pl.BlockSpec((Tc, BB, E), lambda b, tc: (nT - 1 - tc, b, 0)),
                # valid-token counts
                pl.BlockSpec((BB, 1), lambda b, tc: (b, 0)),
                # weights / biases (resident, constant block index)
                pl.BlockSpec((E, G), lambda b, tc: (0, 0)),
                pl.BlockSpec((H, G), lambda b, tc: (0, 0)),
                pl.BlockSpec((1, G), lambda b, tc: (0, 0)),
                pl.BlockSpec((E, G), lambda b, tc: (0, 0)),
                pl.BlockSpec((H, G), lambda b, tc: (0, 0)),
                pl.BlockSpec((1, G), lambda b, tc: (0, 0)),
            ],
            out_specs=pl.BlockSpec((BB, 2 * H), lambda b, tc: (b, 0)),
            scratch_shapes=[
                pltpu.VMEM((Tc, BB, G), jnp.float32),    # gx forward chunk
                pltpu.VMEM((Tc, BB, G), jnp.float32),    # gx reverse chunk
                pltpu.VMEM((BB, H), jnp.float32),        # h_fwd
                pltpu.VMEM((BB, H), jnp.float32),        # c_fwd
                pltpu.VMEM((BB, H), jnp.float32),        # h_rev
                pltpu.VMEM((BB, H), jnp.float32),        # c_rev
                pltpu.VMEM((BB, H), jnp.float32),        # pooled acc fwd
                pltpu.VMEM((BB, H), jnp.float32),        # pooled acc rev
            ],
        ),
        compiler_params=pltpu.CompilerParams(
            dimension_semantics=("parallel", "arbitrary"),
            vmem_limit_bytes=vmem_limit,
        ),
    )

    out_padded = kernel(x_tm, x_tm, len_vec,
                        packed["wih_f"], packed["whh_f"], packed["b_f"],
                        packed["wih_r"], packed["whh_r"], packed["b_r"])
    # output is already packed [forward_pool | backward_pool]; drop batch padding
    return out_padded[:B]


# ---------------------------------------------------------------------------
# Pure-JAX reference (same math, f32, for validation)
# ---------------------------------------------------------------------------
def reference_forward(text, length, p):
    B, T, E = text.shape
    H = p["w_hh_f"].shape[1]

    def run(x_seq, w_ih, w_hh, b_ih, b_hh):
        wih, whh = w_ih.T, w_hh.T
        b = (b_ih + b_hh)[None, :]

        def step(carry, x_t):
            h, c = carry
            gates = x_t @ wih + h @ whh + b
            i = jax.nn.sigmoid(gates[:, :H])
            f = jax.nn.sigmoid(gates[:, H:2 * H])
            g = jnp.tanh(gates[:, 2 * H:3 * H])
            o = jax.nn.sigmoid(gates[:, 3 * H:])
            c = f * c + i * g
            h = o * jnp.tanh(c)
            return (h, c), h

        z = jnp.zeros((B, H), jnp.float32)
        _, hs = lax.scan(step, (z, z), x_seq)
        return hs                                                    # (T, B, H)

    x_tm = jnp.transpose(text.astype(jnp.float32), (1, 0, 2))
    hf = run(x_tm, p["w_ih_f"], p["w_hh_f"], p["b_ih_f"], p["b_hh_f"])
    hr = run(x_tm[::-1], p["w_ih_r"], p["w_hh_r"], p["b_ih_r"], p["b_hh_r"])[::-1]
    out = jnp.transpose(jnp.concatenate([hf, hr], axis=-1), (1, 0, 2))  # (B,T,2H)
    mask = (jnp.arange(T)[None, :] < length[:, None])[:, :, None].astype(jnp.float32)
    cnt = jnp.maximum(jnp.sum(mask, axis=1), 1.0)
    return jnp.sum(out * mask, axis=1) / cnt


if __name__ == "__main__":
    # T=9 with time_chunk=4 exercises both the multi-chunk resident-state path
    # (nT=3) and the T-padding / gated-reverse path (3 padded timesteps).
    B, T, E, H = 2, 9, 32, 32

    key = jax.random.PRNGKey(0)
    k_x, k_p = jax.random.split(key)
    text = jax.random.normal(k_x, (B, T, E), jnp.float32)
    length = jnp.array([5, 9], jnp.int32)
    params = init_params(E, H, k_p)

    out = random_lstm_forward(text, length, params, time_chunk=4)
    out = jax.block_until_ready(out)

    ref = jax.block_until_ready(reference_forward(text, length, params))
    assert out.shape == (B, 2 * H)
    # bf16 matmul operands -> relaxed tolerance vs. the f32 reference
    np.testing.assert_allclose(np.asarray(out), np.asarray(ref),
                               rtol=2e-2, atol=2e-2)
    print("KERNEL_OK")
</pallas_src>

<mosaic_0001>
module attributes {stable_mosaic.version = 11 : i64} {
  func.func @_lstm_pool_kernel(%arg0: i32, %arg1: i32, %arg2: memref<4x8x32xbf16, #tpu.memory_space<vmem>>, %arg3: memref<4x8x32xbf16, #tpu.memory_space<vmem>>, %arg4: memref<8x1xf32, #tpu.memory_space<vmem>>, %arg5: memref<32x128xbf16, #tpu.memory_space<vmem>>, %arg6: memref<32x128xbf16, #tpu.memory_space<vmem>>, %arg7: memref<1x128xf32, #tpu.memory_space<vmem>>, %arg8: memref<32x128xbf16, #tpu.memory_space<vmem>>, %arg9: memref<32x128xbf16, #tpu.memory_space<vmem>>, %arg10: memref<1x128xf32, #tpu.memory_space<vmem>>, %arg11: memref<8x64xf32, #tpu.memory_space<vmem>>, %arg12: memref<4x8x128xf32, #tpu.memory_space<vmem>>, %arg13: memref<4x8x128xf32, #tpu.memory_space<vmem>>, %arg14: memref<8x32xf32, #tpu.memory_space<vmem>>, %arg15: memref<8x32xf32, #tpu.memory_space<vmem>>, %arg16: memref<8x32xf32, #tpu.memory_space<vmem>>, %arg17: memref<8x32xf32, #tpu.memory_space<vmem>>, %arg18: memref<8x32xf32, #tpu.memory_space<vmem>>, %arg19: memref<8x32xf32, #tpu.memory_space<vmem>>) attributes {dimension_semantics = [#tpu.dimension_semantics<parallel>, #tpu.dimension_semantics<arbitrary>], iteration_bounds = array<i64: 1, 3>, scalar_prefetch = 0 : i64, scratch_operands = 8 : i64, tpu.core_type = #tpu.core_type<tc>, window_params = [{transform_indices = @transform_0, window_bounds = array<i64: 4, 8, 32>}, {transform_indices = @transform_1, window_bounds = array<i64: 4, 8, 32>}, {transform_indices = @transform_2, window_bounds = array<i64: 8, 1>}, {pipeline_mode = #tpu.pipeline_mode<synchronous>, transform_indices = @transform_3, window_bounds = array<i64: 32, 128>}, {pipeline_mode = #tpu.pipeline_mode<synchronous>, transform_indices = @transform_4, window_bounds = array<i64: 32, 128>}, {pipeline_mode = #tpu.pipeline_mode<synchronous>, transform_indices = @transform_5, window_bounds = array<i64: 1, 128>}, {pipeline_mode = #tpu.pipeline_mode<synchronous>, transform_indices = @transform_6, window_bounds = array<i64: 32, 128>}, {pipeline_mode = #tpu.pipeline_mode<synchronous>, transform_indices = @transform_7, window_bounds = array<i64: 32, 128>}, {pipeline_mode = #tpu.pipeline_mode<synchronous>, transform_indices = @transform_8, window_bounds = array<i64: 1, 128>}, {transform_indices = @transform_9, window_bounds = array<i64: 8, 64>}]} {
    %c0_i32 = arith.constant 0 : i32
    %0 = arith.cmpi eq, %arg1, %c0_i32 : i32
    %1 = arith.extui %0 : i1 to i32
    %c0_i32_0 = arith.constant 0 : i32
    %2 = arith.cmpi ne, %1, %c0_i32_0 : i32
    scf.if %2 {
      %cst_189 = arith.constant 0.000000e+00 : f32
      %441 = vector.broadcast %cst_189 : f32 to vector<8x32xf32>
      %c0_190 = arith.constant 0 : index
      %c0_191 = arith.constant 0 : index
      %442 = vector.load %arg14[%c0_190, %c0_191] : memref<8x32xf32, #tpu.memory_space<vmem>>, vector<8x32xf32>
      tpu.vector_store %arg14[%c0_190, %c0_191], %441 {strides = array<i32>} : memref<8x32xf32, #tpu.memory_space<vmem>>, vector<8x32xf32>,
      %cst_192 = arith.constant 0.000000e+00 : f32
      %443 = vector.broadcast %cst_192 : f32 to vector<8x32xf32>
      %c0_193 = arith.constant 0 : index
      %c0_194 = arith.constant 0 : index
      %444 = vector.load %arg15[%c0_193, %c0_194] : memref<8x32xf32, #tpu.memory_space<vmem>>, vector<8x32xf32>
      tpu.vector_store %arg15[%c0_193, %c0_194], %443 {strides = array<i32>} : memref<8x32xf32, #tpu.memory_space<vmem>>, vector<8x32xf32>,
      %cst_195 = arith.constant 0.000000e+00 : f32
      %445 = vector.broadcast %cst_195 : f32 to vector<8x32xf32>
      %c0_196 = arith.constant 0 : index
      %c0_197 = arith.constant 0 : index
      %446 = vector.load %arg16[%c0_196, %c0_197] : memref<8x32xf32, #tpu.memory_space<vmem>>, vector<8x32xf32>
      tpu.vector_store %arg16[%c0_196, %c0_197], %445 {strides = array<i32>} : memref<8x32xf32, #tpu.memory_space<vmem>>, vector<8x32xf32>,
      %cst_198 = arith.constant 0.000000e+00 : f32
      %447 = vector.broadcast %cst_198 : f32 to vector<8x32xf32>
      %c0_199 = arith.constant 0 : index
      %c0_200 = arith.constant 0 : index
      %448 = vector.load %arg17[%c0_199, %c0_200] : memref<8x32xf32, #tpu.memory_space<vmem>>, vector<8x32xf32>
      tpu.vector_store %arg17[%c0_199, %c0_200], %447 {strides = array<i32>} : memref<8x32xf32, #tpu.memory_space<vmem>>, vector<8x32xf32>,
      %cst_201 = arith.constant 0.000000e+00 : f32
      %449 = vector.broadcast %cst_201 : f32 to vector<8x32xf32>
      %c0_202 = arith.constant 0 : index
      %c0_203 = arith.constant 0 : index
      %450 = vector.load %arg18[%c0_202, %c0_203] : memref<8x32xf32, #tpu.memory_space<vmem>>, vector<8x32xf32>
      tpu.vector_store %arg18[%c0_202, %c0_203], %449 {strides = array<i32>} : memref<8x32xf32, #tpu.memory_space<vmem>>, vector<8x32xf32>,
      %cst_204 = arith.constant 0.000000e+00 : f32
      %451 = vector.broadcast %cst_204 : f32 to vector<8x32xf32>
      %c0_205 = arith.constant 0 : index
      %c0_206 = arith.constant 0 : index
      %452 = vector.load %arg19[%c0_205, %c0_206] : memref<8x32xf32, #tpu.memory_space<vmem>>, vector<8x32xf32>
      tpu.vector_store %arg19[%c0_205, %c0_206], %451 {strides = array<i32>} : memref<8x32xf32, #tpu.memory_space<vmem>>, vector<8x32xf32>,
    } else {
    }
    %c0 = arith.constant 0 : index
    %c0_1 = arith.constant 0 : index
    %c0_2 = arith.constant 0 : index
    %3 = vector.load %arg2[%c0, %c0_1, %c0_2] : memref<4x8x32xbf16, #tpu.memory_space<vmem>>, vector<4x8x32xbf16>
    %4 = vector.shape_cast %3 : vector<4x8x32xbf16> to vector<32x32xbf16>
    %c0_3 = arith.constant 0 : index
    %c0_4 = arith.constant 0 : index
    %c0_5 = arith.constant 0 : index
    %5 = vector.load %arg3[%c0_3, %c0_4, %c0_5] : memref<4x8x32xbf16, #tpu.memory_space<vmem>>, vector<4x8x32xbf16>
    %6 = vector.shape_cast %5 : vector<4x8x32xbf16> to vector<32x32xbf16>
    %c0_6 = arith.constant 0 : index
    %c0_7 = arith.constant 0 : index
    %7 = vector.load %arg5[%c0_6, %c0_7] : memref<32x128xbf16, #tpu.memory_space<vmem>>, vector<32x128xbf16>
    %cst = arith.constant dense<0.000000e+00> : vector<32x128xf32>
    %8 = tpu.matmul %4, %7, %cst {dimension_numbers = #tpu.dot_dimension_numbers<[1], [0], [0], [1], [0, 0, 1, 1], [], []>} : vector<32x32xbf16>, vector<32x128xbf16>, vector<32x128xf32> -> vector<32x128xf32>
    %c0_8 = arith.constant 0 : index
    %c0_9 = arith.constant 0 : index
    %9 = vector.load %arg7[%c0_8, %c0_9] : memref<1x128xf32, #tpu.memory_space<vmem>>, vector<1x128xf32>
    %10 = vector.broadcast %9 : vector<1x128xf32> to vector<32x128xf32>
    %11 = arith.addf %8, %10 : vector<32x128xf32>
    %c0_10 = arith.constant 0 : index
    %c0_11 = arith.constant 0 : index
    %12 = vector.load %arg8[%c0_10, %c0_11] : memref<32x128xbf16, #tpu.memory_space<vmem>>, vector<32x128xbf16>
    %cst_12 = arith.constant dense<0.000000e+00> : vector<32x128xf32>
    %13 = tpu.matmul %6, %12, %cst_12 {dimension_numbers = #tpu.dot_dimension_numbers<[1], [0], [0], [1], [0, 0, 1, 1], [], []>} : vector<32x32xbf16>, vector<32x128xbf16>, vector<32x128xf32> -> vector<32x128xf32>
    %c0_13 = arith.constant 0 : index
    %c0_14 = arith.constant 0 : index
    %14 = vector.load %arg10[%c0_13, %c0_14] : memref<1x128xf32, #tpu.memory_space<vmem>>, vector<1x128xf32>
    %15 = vector.broadcast %14 : vector<1x128xf32> to vector<32x128xf32>
    %16 = arith.addf %13, %15 : vector<32x128xf32>
    %17 = vector.shape_cast %11 : vector<32x128xf32> to vector<4x8x128xf32>
    %c0_15 = arith.constant 0 : index
    %c0_16 = arith.constant 0 : index
    %c0_17 = arith.constant 0 : index
    %18 = vector.load %arg12[%c0_15, %c0_16, %c0_17] : memref<4x8x128xf32, #tpu.memory_space<vmem>>, vector<4x8x128xf32>
    tpu.vector_store %arg12[%c0_15, %c0_16, %c0_17], %17 {strides = array<i32>} : memref<4x8x128xf32, #tpu.memory_space<vmem>>, vector<4x8x128xf32>,
    %19 = vector.shape_cast %16 : vector<32x128xf32> to vector<4x8x128xf32>
    %c0_18 = arith.constant 0 : index
    %c0_19 = arith.constant 0 : index
    %c0_20 = arith.constant 0 : index
    %20 = vector.load %arg13[%c0_18, %c0_19, %c0_20] : memref<4x8x128xf32, #tpu.memory_space<vmem>>, vector<4x8x128xf32>
    tpu.vector_store %arg13[%c0_18, %c0_19, %c0_20], %19 {strides = array<i32>} : memref<4x8x128xf32, #tpu.memory_space<vmem>>, vector<4x8x128xf32>,
    %c0_21 = arith.constant 0 : index
    %c0_22 = arith.constant 0 : index
    %21 = vector.load %arg4[%c0_21, %c0_22] : memref<8x1xf32, #tpu.memory_space<vmem>>, vector<8x1xf32>
    %c0_23 = arith.constant 0 : index
    %c0_24 = arith.constant 0 : index
    %22 = vector.load %arg14[%c0_23, %c0_24] : memref<8x32xf32, #tpu.memory_space<vmem>>, vector<8x32xf32>
    %c0_25 = arith.constant 0 : index
    %c0_26 = arith.constant 0 : index
    %23 = vector.load %arg15[%c0_25, %c0_26] : memref<8x32xf32, #tpu.memory_space<vmem>>, vector<8x32xf32>
    %c0_27 = arith.constant 0 : index
    %c0_28 = arith.constant 0 : index
    %24 = vector.load %arg16[%c0_27, %c0_28] : memref<8x32xf32, #tpu.memory_space<vmem>>, vector<8x32xf32>
    %c0_29 = arith.constant 0 : index
    %c0_30 = arith.constant 0 : index
    %25 = vector.load %arg17[%c0_29, %c0_30] : memref<8x32xf32, #tpu.memory_space<vmem>>, vector<8x32xf32>
    %c0_31 = arith.constant 0 : index
    %c0_32 = arith.constant 0 : index
    %26 = vector.load %arg18[%c0_31, %c0_32] : memref<8x32xf32, #tpu.memory_space<vmem>>, vector<8x32xf32>
    %c0_33 = arith.constant 0 : index
    %c0_34 = arith.constant 0 : index
    %27 = vector.load %arg19[%c0_33, %c0_34] : memref<8x32xf32, #tpu.memory_space<vmem>>, vector<8x32xf32>
    %c0_i32_35 = arith.constant 0 : i32
    %28 = arith.index_cast %c0_i32_35 : i32 to index
    %c0_36 = arith.constant 0 : index
    %c0_37 = arith.constant 0 : index
    %29 = vector.load %arg12[%28, %c0_36, %c0_37] : memref<4x8x128xf32, #tpu.memory_space<vmem>>, vector<1x8x128xf32>
    %30 = vector.shape_cast %29 : vector<1x8x128xf32> to vector<8x128xf32>
    %31 = arith.truncf %22 : vector<8x32xf32> to vector<8x32xbf16>
    %c0_38 = arith.constant 0 : index
    %c0_39 = arith.constant 0 : index
    %32 = vector.load %arg6[%c0_38, %c0_39] : memref<32x128xbf16, #tpu.memory_space<vmem>>, vector<32x128xbf16>
    %cst_40 = arith.constant dense<0.000000e+00> : vector<8x128xf32>
    %33 = tpu.matmul %31, %32, %cst_40 {dimension_numbers = #tpu.dot_dimension_numbers<[1], [0], [0], [1], [0, 0, 1, 1], [], []>} : vector<8x32xbf16>, vector<32x128xbf16>, vector<8x128xf32> -> vector<8x128xf32>
    %34 = arith.addf %30, %33 : vector<8x128xf32>
    %35 = vector.extract_strided_slice %34 {offsets = [0, 0], sizes = [8, 32], strides = [1, 1]} : vector<8x128xf32> to vector<8x32xf32>
    %cst_41 = arith.constant 5.000000e-01 : f32
    %36 = vector.broadcast %cst_41 : f32 to vector<8x32xf32>
    %37 = arith.mulf %36, %35 : vector<8x32xf32>
    %38 = math.tanh %37 : vector<8x32xf32>
    %cst_42 = arith.constant 5.000000e-01 : f32
    %39 = vector.broadcast %cst_42 : f32 to vector<8x32xf32>
    %40 = arith.mulf %39, %38 : vector<8x32xf32>
    %cst_43 = arith.constant 5.000000e-01 : f32
    %41 = vector.broadcast %cst_43 : f32 to vector<8x32xf32>
    %42 = arith.addf %40, %41 : vector<8x32xf32>
    %43 = vector.extract_strided_slice %34 {offsets = [0, 32], sizes = [8, 32], strides = [1, 1]} : vector<8x128xf32> to vector<8x32xf32>
    %cst_44 = arith.constant 5.000000e-01 : f32
    %44 = vector.broadcast %cst_44 : f32 to vector<8x32xf32>
    %45 = arith.mulf %44, %43 : vector<8x32xf32>
    %46 = math.tanh %45 : vector<8x32xf32>
    %cst_45 = arith.constant 5.000000e-01 : f32
    %47 = vector.broadcast %cst_45 : f32 to vector<8x32xf32>
    %48 = arith.mulf %47, %46 : vector<8x32xf32>
    %cst_46 = arith.constant 5.000000e-01 : f32
    %49 = vector.broadcast %cst_46 : f32 to vector<8x32xf32>
    %50 = arith.addf %48, %49 : vector<8x32xf32>
    %51 = vector.extract_strided_slice %34 {offsets = [0, 64], sizes = [8, 32], strides = [1, 1]} : vector<8x128xf32> to vector<8x32xf32>
    %52 = math.tanh %51 : vector<8x32xf32>
    %53 = vector.extract_strided_slice %34 {offsets = [0, 96], sizes = [8, 32], strides = [1, 1]} : vector<8x128xf32> to vector<8x32xf32>
    %cst_47 = arith.constant 5.000000e-01 : f32
    %54 = vector.broadcast %cst_47 : f32 to vector<8x32xf32>
    %55 = arith.mulf %54, %53 : vector<8x32xf32>
    %56 = math.tanh %55 : vector<8x32xf32>
    %cst_48 = arith.constant 5.000000e-01 : f32
    %57 = vector.broadcast %cst_48 : f32 to vector<8x32xf32>
    %58 = arith.mulf %57, %56 : vector<8x32xf32>
    %cst_49 = arith.constant 5.000000e-01 : f32
    %59 = vector.broadcast %cst_49 : f32 to vector<8x32xf32>
    %60 = arith.addf %58, %59 : vector<8x32xf32>
    %61 = arith.mulf %50, %23 : vector<8x32xf32>
    %62 = arith.mulf %42, %52 : vector<8x32xf32>
    %63 = arith.addf %61, %62 : vector<8x32xf32>
    %64 = math.tanh %63 : vector<8x32xf32>
    %65 = arith.mulf %60, %64 : vector<8x32xf32>
    %c4_i32 = arith.constant 4 : i32
    %66 = arith.muli %arg1, %c4_i32 : i32
    %67 = arith.addi %66, %c0_i32_35 : i32
    %68 = arith.sitofp %67 : i32 to f32
    %69 = vector.broadcast %68 : f32 to vector<8x1xf32>
    %70 = arith.cmpf ogt, %21, %69 : vector<8x1xf32>
    %cst_50 = arith.constant 0.000000e+00 : f32
    %71 = vector.shape_cast %70 : vector<8x1xi1> to vector<8x1xi1>
    %72 = vector.broadcast %71 : vector<8x1xi1> to vector<8x32xi1>
    %73 = vector.broadcast %cst_50 : f32 to vector<8x32xf32>
    %74 = arith.select %72, %65, %73 : vector<8x32xi1>, vector<8x32xf32>
    %75 = arith.addf %26, %74 : vector<8x32xf32>
    %c3_i32 = arith.constant 3 : i32
    %76 = arith.subi %c3_i32, %c0_i32_35 : i32
    %77 = arith.index_cast %76 : i32 to index
    %c0_51 = arith.constant 0 : index
    %c0_52 = arith.constant 0 : index
    %78 = vector.load %arg13[%77, %c0_51, %c0_52] : memref<4x8x128xf32, #tpu.memory_space<vmem>>, vector<1x8x128xf32>
    %79 = vector.shape_cast %78 : vector<1x8x128xf32> to vector<8x128xf32>
    %80 = arith.truncf %24 : vector<8x32xf32> to vector<8x32xbf16>
    %c0_53 = arith.constant 0 : index
    %c0_54 = arith.constant 0 : index
    %81 = vector.load %arg9[%c0_53, %c0_54] : memref<32x128xbf16, #tpu.memory_space<vmem>>, vector<32x128xbf16>
    %cst_55 = arith.constant dense<0.000000e+00> : vector<8x128xf32>
    %82 = tpu.matmul %80, %81, %cst_55 {dimension_numbers = #tpu.dot_dimension_numbers<[1], [0], [0], [1], [0, 0, 1, 1], [], []>} : vector<8x32xbf16>, vector<32x128xbf16>, vector<8x128xf32> -> vector<8x128xf32>
    %83 = arith.addf %79, %82 : vector<8x128xf32>
    %84 = vector.extract_strided_slice %83 {offsets = [0, 0], sizes = [8, 32], strides = [1, 1]} : vector<8x128xf32> to vector<8x32xf32>
    %cst_56 = arith.constant 5.000000e-01 : f32
    %85 = vector.broadcast %cst_56 : f32 to vector<8x32xf32>
    %86 = arith.mulf %85, %84 : vector<8x32xf32>
    %87 = math.tanh %86 : vector<8x32xf32>
    %cst_57 = arith.constant 5.000000e-01 : f32
    %88 = vector.broadcast %cst_57 : f32 to vector<8x32xf32>
    %89 = arith.mulf %88, %87 : vector<8x32xf32>
    %cst_58 = arith.constant 5.000000e-01 : f32
    %90 = vector.broadcast %cst_58 : f32 to vector<8x32xf32>
    %91 = arith.addf %89, %90 : vector<8x32xf32>
    %92 = vector.extract_strided_slice %83 {offsets = [0, 32], sizes = [8, 32], strides = [1, 1]} : vector<8x128xf32> to vector<8x32xf32>
    %cst_59 = arith.constant 5.000000e-01 : f32
    %93 = vector.broadcast %cst_59 : f32 to vector<8x32xf32>
    %94 = arith.mulf %93, %92 : vector<8x32xf32>
    %95 = math.tanh %94 : vector<8x32xf32>
    %cst_60 = arith.constant 5.000000e-01 : f32
    %96 = vector.broadcast %cst_60 : f32 to vector<8x32xf32>
    %97 = arith.mulf %96, %95 : vector<8x32xf32>
    %cst_61 = arith.constant 5.000000e-01 : f32
    %98 = vector.broadcast %cst_61 : f32 to vector<8x32xf32>
    %99 = arith.addf %97, %98 : vector<8x32xf32>
    %100 = vector.extract_strided_slice %83 {offsets = [0, 64], sizes = [8, 32], strides = [1, 1]} : vector<8x128xf32> to vector<8x32xf32>
    %101 = math.tanh %100 : vector<8x32xf32>
    %102 = vector.extract_strided_slice %83 {offsets = [0, 96], sizes = [8, 32], strides = [1, 1]} : vector<8x128xf32> to vector<8x32xf32>
    %cst_62 = arith.constant 5.000000e-01 : f32
    %103 = vector.broadcast %cst_62 : f32 to vector<8x32xf32>
    %104 = arith.mulf %103, %102 : vector<8x32xf32>
    %105 = math.tanh %104 : vector<8x32xf32>
    %cst_63 = arith.constant 5.000000e-01 : f32
    %106 = vector.broadcast %cst_63 : f32 to vector<8x32xf32>
    %107 = arith.mulf %106, %105 : vector<8x32xf32>
    %cst_64 = arith.constant 5.000000e-01 : f32
    %108 = vector.broadcast %cst_64 : f32 to vector<8x32xf32>
    %109 = arith.addf %107, %108 : vector<8x32xf32>
    %110 = arith.mulf %99, %25 : vector<8x32xf32>
    %111 = arith.mulf %91, %101 : vector<8x32xf32>
    %112 = arith.addf %110, %111 : vector<8x32xf32>
    %113 = math.tanh %112 : vector<8x32xf32>
    %114 = arith.mulf %109, %113 : vector<8x32xf32>
    %c2_i32 = arith.constant 2 : i32
    %115 = arith.subi %c2_i32, %arg1 : i32
    %c4_i32_65 = arith.constant 4 : i32
    %116 = arith.muli %115, %c4_i32_65 : i32
    %117 = arith.addi %116, %76 : i32
    %c9_i32 = arith.constant 9 : i32
    %118 = arith.cmpi slt, %117, %c9_i32 : i32
    %119 = arith.select %118, %114, %24 : vector<8x32xf32>
    %120 = arith.select %118, %112, %25 : vector<8x32xf32>
    %121 = arith.sitofp %117 : i32 to f32
    %122 = vector.broadcast %121 : f32 to vector<8x1xf32>
    %123 = arith.cmpf ogt, %21, %122 : vector<8x1xf32>
    %cst_66 = arith.constant 0.000000e+00 : f32
    %124 = vector.shape_cast %123 : vector<8x1xi1> to vector<8x1xi1>
    %125 = vector.broadcast %124 : vector<8x1xi1> to vector<8x32xi1>
    %126 = vector.broadcast %cst_66 : f32 to vector<8x32xf32>
    %127 = arith.select %125, %119, %126 : vector<8x32xi1>, vector<8x32xf32>
    %128 = arith.addf %27, %127 : vector<8x32xf32>
    %c1_i32 = arith.constant 1 : i32
    %129 = arith.index_cast %c1_i32 : i32 to index
    %c0_67 = arith.constant 0 : index
    %c0_68 = arith.constant 0 : index
    %130 = vector.load %arg12[%129, %c0_67, %c0_68] : memref<4x8x128xf32, #tpu.memory_space<vmem>>, vector<1x8x128xf32>
    %131 = vector.shape_cast %130 : vector<1x8x128xf32> to vector<8x128xf32>
    %132 = arith.truncf %65 : vector<8x32xf32> to vector<8x32xbf16>
    %c0_69 = arith.constant 0 : index
    %c0_70 = arith.constant 0 : index
    %133 = vector.load %arg6[%c0_69, %c0_70] : memref<32x128xbf16, #tpu.memory_space<vmem>>, vector<32x128xbf16>
    %cst_71 = arith.constant dense<0.000000e+00> : vector<8x128xf32>
    %134 = tpu.matmul %132, %133, %cst_71 {dimension_numbers = #tpu.dot_dimension_numbers<[1], [0], [0], [1], [0, 0, 1, 1], [], []>} : vector<8x32xbf16>, vector<32x128xbf16>, vector<8x128xf32> -> vector<8x128xf32>
    %135 = arith.addf %131, %134 : vector<8x128xf32>
    %136 = vector.extract_strided_slice %135 {offsets = [0, 0], sizes = [8, 32], strides = [1, 1]} : vector<8x128xf32> to vector<8x32xf32>
    %cst_72 = arith.constant 5.000000e-01 : f32
    %137 = vector.broadcast %cst_72 : f32 to vector<8x32xf32>
    %138 = arith.mulf %137, %136 : vector<8x32xf32>
    %139 = math.tanh %138 : vector<8x32xf32>
    %cst_73 = arith.constant 5.000000e-01 : f32
    %140 = vector.broadcast %cst_73 : f32 to vector<8x32xf32>
    %141 = arith.mulf %140, %139 : vector<8x32xf32>
    %cst_74 = arith.constant 5.000000e-01 : f32
    %142 = vector.broadcast %cst_74 : f32 to vector<8x32xf32>
    %143 = arith.addf %141, %142 : vector<8x32xf32>
    %144 = vector.extract_strided_slice %135 {offsets = [0, 32], sizes = [8, 32], strides = [1, 1]} : vector<8x128xf32> to vector<8x32xf32>
    %cst_75 = arith.constant 5.000000e-01 : f32
    %145 = vector.broadcast %cst_75 : f32 to vector<8x32xf32>
    %146 = arith.mulf %145, %144 : vector<8x32xf32>
    %147 = math.tanh %146 : vector<8x32xf32>
    %cst_76 = arith.constant 5.000000e-01 : f32
    %148 = vector.broadcast %cst_76 : f32 to vector<8x32xf32>
    %149 = arith.mulf %148, %147 : vector<8x32xf32>
    %cst_77 = arith.constant 5.000000e-01 : f32
    %150 = vector.broadcast %cst_77 : f32 to vector<8x32xf32>
    %151 = arith.addf %149, %150 : vector<8x32xf32>
    %152 = vector.extract_strided_slice %135 {offsets = [0, 64], sizes = [8, 32], strides = [1, 1]} : vector<8x128xf32> to vector<8x32xf32>
    %153 = math.tanh %152 : vector<8x32xf32>
    %154 = vector.extract_strided_slice %135 {offsets = [0, 96], sizes = [8, 32], strides = [1, 1]} : vector<8x128xf32> to vector<8x32xf32>
    %cst_78 = arith.constant 5.000000e-01 : f32
    %155 = vector.broadcast %cst_78 : f32 to vector<8x32xf32>
    %156 = arith.mulf %155, %154 : vector<8x32xf32>
    %157 = math.tanh %156 : vector<8x32xf32>
    %cst_79 = arith.constant 5.000000e-01 : f32
    %158 = vector.broadcast %cst_79 : f32 to vector<8x32xf32>
    %159 = arith.mulf %158, %157 : vector<8x32xf32>
    %cst_80 = arith.constant 5.000000e-01 : f32
    %160 = vector.broadcast %cst_80 : f32 to vector<8x32xf32>
    %161 = arith.addf %159, %160 : vector<8x32xf32>
    %162 = arith.mulf %151, %63 : vector<8x32xf32>
    %163 = arith.mulf %143, %153 : vector<8x32xf32>
    %164 = arith.addf %162, %163 : vector<8x32xf32>
    %165 = math.tanh %164 : vector<8x32xf32>
    %166 = arith.mulf %161, %165 : vector<8x32xf32>
    %c4_i32_81 = arith.constant 4 : i32
    %167 = arith.muli %arg1, %c4_i32_81 : i32
    %168 = arith.addi %167, %c1_i32 : i32
    %169 = arith.sitofp %168 : i32 to f32
    %170 = vector.broadcast %169 : f32 to vector<8x1xf32>
    %171 = arith.cmpf ogt, %21, %170 : vector<8x1xf32>
    %cst_82 = arith.constant 0.000000e+00 : f32
    %172 = vector.shape_cast %171 : vector<8x1xi1> to vector<8x1xi1>
    %173 = vector.broadcast %172 : vector<8x1xi1> to vector<8x32xi1>
    %174 = vector.broadcast %cst_82 : f32 to vector<8x32xf32>
    %175 = arith.select %173, %166, %174 : vector<8x32xi1>, vector<8x32xf32>
    %176 = arith.addf %75, %175 : vector<8x32xf32>
    %c3_i32_83 = arith.constant 3 : i32
    %177 = arith.subi %c3_i32_83, %c1_i32 : i32
    %178 = arith.index_cast %177 : i32 to index
    %c0_84 = arith.constant 0 : index
    %c0_85 = arith.constant 0 : index
    %179 = vector.load %arg13[%178, %c0_84, %c0_85] : memref<4x8x128xf32, #tpu.memory_space<vmem>>, vector<1x8x128xf32>
    %180 = vector.shape_cast %179 : vector<1x8x128xf32> to vector<8x128xf32>
    %181 = arith.truncf %119 : vector<8x32xf32> to vector<8x32xbf16>
    %c0_86 = arith.constant 0 : index
    %c0_87 = arith.constant 0 : index
    %182 = vector.load %arg9[%c0_86, %c0_87] : memref<32x128xbf16, #tpu.memory_space<vmem>>, vector<32x128xbf16>
    %cst_88 = arith.constant dense<0.000000e+00> : vector<8x128xf32>
    %183 = tpu.matmul %181, %182, %cst_88 {dimension_numbers = #tpu.dot_dimension_numbers<[1], [0], [0], [1], [0, 0, 1, 1], [], []>} : vector<8x32xbf16>, vector<32x128xbf16>, vector<8x128xf32> -> vector<8x128xf32>
    %184 = arith.addf %180, %183 : vector<8x128xf32>
    %185 = vector.extract_strided_slice %184 {offsets = [0, 0], sizes = [8, 32], strides = [1, 1]} : vector<8x128xf32> to vector<8x32xf32>
    %cst_89 = arith.constant 5.000000e-01 : f32
    %186 = vector.broadcast %cst_89 : f32 to vector<8x32xf32>
    %187 = arith.mulf %186, %185 : vector<8x32xf32>
    %188 = math.tanh %187 : vector<8x32xf32>
    %cst_90 = arith.constant 5.000000e-01 : f32
    %189 = vector.broadcast %cst_90 : f32 to vector<8x32xf32>
    %190 = arith.mulf %189, %188 : vector<8x32xf32>
    %cst_91 = arith.constant 5.000000e-01 : f32
    %191 = vector.broadcast %cst_91 : f32 to vector<8x32xf32>
    %192 = arith.addf %190, %191 : vector<8x32xf32>
    %193 = vector.extract_strided_slice %184 {offsets = [0, 32], sizes = [8, 32], strides = [1, 1]} : vector<8x128xf32> to vector<8x32xf32>
    %cst_92 = arith.constant 5.000000e-01 : f32
    %194 = vector.broadcast %cst_92 : f32 to vector<8x32xf32>
    %195 = arith.mulf %194, %193 : vector<8x32xf32>
    %196 = math.tanh %195 : vector<8x32xf32>
    %cst_93 = arith.constant 5.000000e-01 : f32
    %197 = vector.broadcast %cst_93 : f32 to vector<8x32xf32>
    %198 = arith.mulf %197, %196 : vector<8x32xf32>
    %cst_94 = arith.constant 5.000000e-01 : f32
    %199 = vector.broadcast %cst_94 : f32 to vector<8x32xf32>
    %200 = arith.addf %198, %199 : vector<8x32xf32>
    %201 = vector.extract_strided_slice %184 {offsets = [0, 64], sizes = [8, 32], strides = [1, 1]} : vector<8x128xf32> to vector<8x32xf32>
    %202 = math.tanh %201 : vector<8x32xf32>
    %203 = vector.extract_strided_slice %184 {offsets = [0, 96], sizes = [8, 32], strides = [1, 1]} : vector<8x128xf32> to vector<8x32xf32>
    %cst_95 = arith.constant 5.000000e-01 : f32
    %204 = vector.broadcast %cst_95 : f32 to vector<8x32xf32>
    %205 = arith.mulf %204, %203 : vector<8x32xf32>
    %206 = math.tanh %205 : vector<8x32xf32>
    %cst_96 = arith.constant 5.000000e-01 : f32
    %207 = vector.broadcast %cst_96 : f32 to vector<8x32xf32>
    %208 = arith.mulf %207, %206 : vector<8x32xf32>
    %cst_97 = arith.constant 5.000000e-01 : f32
    %209 = vector.broadcast %cst_97 : f32 to vector<8x32xf32>
    %210 = arith.addf %208, %209 : vector<8x32xf32>
    %211 = arith.mulf %200, %120 : vector<8x32xf32>
    %212 = arith.mulf %192, %202 : vector<8x32xf32>
    %213 = arith.addf %211, %212 : vector<8x32xf32>
    %214 = math.tanh %213 : vector<8x32xf32>
    %215 = arith.mulf %210, %214 : vector<8x32xf32>
    %c2_i32_98 = arith.constant 2 : i32
    %216 = arith.subi %c2_i32_98, %arg1 : i32
    %c4_i32_99 = arith.constant 4 : i32
    %217 = arith.muli %216, %c4_i32_99 : i32
    %218 = arith.addi %217, %177 : i32
    %c9_i32_100 = arith.constant 9 : i32
    %219 = arith.cmpi slt, %218, %c9_i32_100 : i32
    %220 = arith.select %219, %215, %119 : vector<8x32xf32>
    %221 = arith.select %219, %213, %120 : vector<8x32xf32>
    %222 = arith.sitofp %218 : i32 to f32
    %223 = vector.broadcast %222 : f32 to vector<8x1xf32>
    %224 = arith.cmpf ogt, %21, %223 : vector<8x1xf32>
    %cst_101 = arith.constant 0.000000e+00 : f32
    %225 = vector.shape_cast %224 : vector<8x1xi1> to vector<8x1xi1>
    %226 = vector.broadcast %225 : vector<8x1xi1> to vector<8x32xi1>
    %227 = vector.broadcast %cst_101 : f32 to vector<8x32xf32>
    %228 = arith.select %226, %220, %227 : vector<8x32xi1>, vector<8x32xf32>
    %229 = arith.addf %128, %228 : vector<8x32xf32>
    %c2_i32_102 = arith.constant 2 : i32
    %230 = arith.index_cast %c2_i32_102 : i32 to index
    %c0_103 = arith.constant 0 : index
    %c0_104 = arith.constant 0 : index
    %231 = vector.load %arg12[%230, %c0_103, %c0_104] : memref<4x8x128xf32, #tpu.memory_space<vmem>>, vector<1x8x128xf32>
    %232 = vector.shape_cast %231 : vector<1x8x128xf32> to vector<8x128xf32>
    %233 = arith.truncf %166 : vector<8x32xf32> to vector<8x32xbf16>
    %c0_105 = arith.constant 0 : index
    %c0_106 = arith.constant 0 : index
    %234 = vector.load %arg6[%c0_105, %c0_106] : memref<32x128xbf16, #tpu.memory_space<vmem>>, vector<32x128xbf16>
    %cst_107 = arith.constant dense<0.000000e+00> : vector<8x128xf32>
    %235 = tpu.matmul %233, %234, %cst_107 {dimension_numbers = #tpu.dot_dimension_numbers<[1], [0], [0], [1], [0, 0, 1, 1], [], []>} : vector<8x32xbf16>, vector<32x128xbf16>, vector<8x128xf32> -> vector<8x128xf32>
    %236 = arith.addf %232, %235 : vector<8x128xf32>
    %237 = vector.extract_strided_slice %236 {offsets = [0, 0], sizes = [8, 32], strides = [1, 1]} : vector<8x128xf32> to vector<8x32xf32>
    %cst_108 = arith.constant 5.000000e-01 : f32
    %238 = vector.broadcast %cst_108 : f32 to vector<8x32xf32>
    %239 = arith.mulf %238, %237 : vector<8x32xf32>
    %240 = math.tanh %239 : vector<8x32xf32>
    %cst_109 = arith.constant 5.000000e-01 : f32
    %241 = vector.broadcast %cst_109 : f32 to vector<8x32xf32>
    %242 = arith.mulf %241, %240 : vector<8x32xf32>
    %cst_110 = arith.constant 5.000000e-01 : f32
    %243 = vector.broadcast %cst_110 : f32 to vector<8x32xf32>
    %244 = arith.addf %242, %243 : vector<8x32xf32>
    %245 = vector.extract_strided_slice %236 {offsets = [0, 32], sizes = [8, 32], strides = [1, 1]} : vector<8x128xf32> to vector<8x32xf32>
    %cst_111 = arith.constant 5.000000e-01 : f32
    %246 = vector.broadcast %cst_111 : f32 to vector<8x32xf32>
    %247 = arith.mulf %246, %245 : vector<8x32xf32>
    %248 = math.tanh %247 : vector<8x32xf32>
    %cst_112 = arith.constant 5.000000e-01 : f32
    %249 = vector.broadcast %cst_112 : f32 to vector<8x32xf32>
    %250 = arith.mulf %249, %248 : vector<8x32xf32>
    %cst_113 = arith.constant 5.000000e-01 : f32
    %251 = vector.broadcast %cst_113 : f32 to vector<8x32xf32>
    %252 = arith.addf %250, %251 : vector<8x32xf32>
    %253 = vector.extract_strided_slice %236 {offsets = [0, 64], sizes = [8, 32], strides = [1, 1]} : vector<8x128xf32> to vector<8x32xf32>
    %254 = math.tanh %253 : vector<8x32xf32>
    %255 = vector.extract_strided_slice %236 {offsets = [0, 96], sizes = [8, 32], strides = [1, 1]} : vector<8x128xf32> to vector<8x32xf32>
    %cst_114 = arith.constant 5.000000e-01 : f32
    %256 = vector.broadcast %cst_114 : f32 to vector<8x32xf32>
    %257 = arith.mulf %256, %255 : vector<8x32xf32>
    %258 = math.tanh %257 : vector<8x32xf32>
    %cst_115 = arith.constant 5.000000e-01 : f32
    %259 = vector.broadcast %cst_115 : f32 to vector<8x32xf32>
    %260 = arith.mulf %259, %258 : vector<8x32xf32>
    %cst_116 = arith.constant 5.000000e-01 : f32
    %261 = vector.broadcast %cst_116 : f32 to vector<8x32xf32>
    %262 = arith.addf %260, %261 : vector<8x32xf32>
    %263 = arith.mulf %252, %164 : vector<8x32xf32>
    %264 = arith.mulf %244, %254 : vector<8x32xf32>
    %265 = arith.addf %263, %264 : vector<8x32xf32>
    %266 = math.tanh %265 : vector<8x32xf32>
    %267 = arith.mulf %262, %266 : vector<8x32xf32>
    %c4_i32_117 = arith.constant 4 : i32
    %268 = arith.muli %arg1, %c4_i32_117 : i32
    %269 = arith.addi %268, %c2_i32_102 : i32
    %270 = arith.sitofp %269 : i32 to f32
    %271 = vector.broadcast %270 : f32 to vector<8x1xf32>
    %272 = arith.cmpf ogt, %21, %271 : vector<8x1xf32>
    %cst_118 = arith.constant 0.000000e+00 : f32
    %273 = vector.shape_cast %272 : vector<8x1xi1> to vector<8x1xi1>
    %274 = vector.broadcast %273 : vector<8x1xi1> to vector<8x32xi1>
    %275 = vector.broadcast %cst_118 : f32 to vector<8x32xf32>
    %276 = arith.select %274, %267, %275 : vector<8x32xi1>, vector<8x32xf32>
    %277 = arith.addf %176, %276 : vector<8x32xf32>
    %c3_i32_119 = arith.constant 3 : i32
    %278 = arith.subi %c3_i32_119, %c2_i32_102 : i32
    %279 = arith.index_cast %278 : i32 to index
    %c0_120 = arith.constant 0 : index
    %c0_121 = arith.constant 0 : index
    %280 = vector.load %arg13[%279, %c0_120, %c0_121] : memref<4x8x128xf32, #tpu.memory_space<vmem>>, vector<1x8x128xf32>
    %281 = vector.shape_cast %280 : vector<1x8x128xf32> to vector<8x128xf32>
    %282 = arith.truncf %220 : vector<8x32xf32> to vector<8x32xbf16>
    %c0_122 = arith.constant 0 : index
    %c0_123 = arith.constant 0 : index
    %283 = vector.load %arg9[%c0_122, %c0_123] : memref<32x128xbf16, #tpu.memory_space<vmem>>, vector<32x128xbf16>
    %cst_124 = arith.constant dense<0.000000e+00> : vector<8x128xf32>
    %284 = tpu.matmul %282, %283, %cst_124 {dimension_numbers = #tpu.dot_dimension_numbers<[1], [0], [0], [1], [0, 0, 1, 1], [], []>} : vector<8x32xbf16>, vector<32x128xbf16>, vector<8x128xf32> -> vector<8x128xf32>
    %285 = arith.addf %281, %284 : vector<8x128xf32>
    %286 = vector.extract_strided_slice %285 {offsets = [0, 0], sizes = [8, 32], strides = [1, 1]} : vector<8x128xf32> to vector<8x32xf32>
    %cst_125 = arith.constant 5.000000e-01 : f32
    %287 = vector.broadcast %cst_125 : f32 to vector<8x32xf32>
    %288 = arith.mulf %287, %286 : vector<8x32xf32>
    %289 = math.tanh %288 : vector<8x32xf32>
    %cst_126 = arith.constant 5.000000e-01 : f32
    %290 = vector.broadcast %cst_126 : f32 to vector<8x32xf32>
    %291 = arith.mulf %290, %289 : vector<8x32xf32>
    %cst_127 = arith.constant 5.000000e-01 : f32
    %292 = vector.broadcast %cst_127 : f32 to vector<8x32xf32>
    %293 = arith.addf %291, %292 : vector<8x32xf32>
    %294 = vector.extract_strided_slice %285 {offsets = [0, 32], sizes = [8, 32], strides = [1, 1]} : vector<8x128xf32> to vector<8x32xf32>
    %cst_128 = arith.constant 5.000000e-01 : f32
    %295 = vector.broadcast %cst_128 : f32 to vector<8x32xf32>
    %296 = arith.mulf %295, %294 : vector<8x32xf32>
    %297 = math.tanh %296 : vector<8x32xf32>
    %cst_129 = arith.constant 5.000000e-01 : f32
    %298 = vector.broadcast %cst_129 : f32 to vector<8x32xf32>
    %299 = arith.mulf %298, %297 : vector<8x32xf32>
    %cst_130 = arith.constant 5.000000e-01 : f32
    %300 = vector.broadcast %cst_130 : f32 to vector<8x32xf32>
    %301 = arith.addf %299, %300 : vector<8x32xf32>
    %302 = vector.extract_strided_slice %285 {offsets = [0, 64], sizes = [8, 32], strides = [1, 1]} : vector<8x128xf32> to vector<8x32xf32>
    %303 = math.tanh %302 : vector<8x32xf32>
    %304 = vector.extract_strided_slice %285 {offsets = [0, 96], sizes = [8, 32], strides = [1, 1]} : vector<8x128xf32> to vector<8x32xf32>
    %cst_131 = arith.constant 5.000000e-01 : f32
    %305 = vector.broadcast %cst_131 : f32 to vector<8x32xf32>
    %306 = arith.mulf %305, %304 : vector<8x32xf32>
    %307 = math.tanh %306 : vector<8x32xf32>
    %cst_132 = arith.constant 5.000000e-01 : f32
    %308 = vector.broadcast %cst_132 : f32 to vector<8x32xf32>
    %309 = arith.mulf %308, %307 : vector<8x32xf32>
    %cst_133 = arith.constant 5.000000e-01 : f32
    %310 = vector.broadcast %cst_133 : f32 to vector<8x32xf32>
    %311 = arith.addf %309, %310 : vector<8x32xf32>
    %312 = arith.mulf %301, %221 : vector<8x32xf32>
    %313 = arith.mulf %293, %303 : vector<8x32xf32>
    %314 = arith.addf %312, %313 : vector<8x32xf32>
    %315 = math.tanh %314 : vector<8x32xf32>
    %316 = arith.mulf %311, %315 : vector<8x32xf32>
    %c2_i32_134 = arith.constant 2 : i32
    %317 = arith.subi %c2_i32_134, %arg1 : i32
    %c4_i32_135 = arith.constant 4 : i32
    %318 = arith.muli %317, %c4_i32_135 : i32
    %319 = arith.addi %318, %278 : i32
    %c9_i32_136 = arith.constant 9 : i32
    %320 = arith.cmpi slt, %319, %c9_i32_136 : i32
    %321 = arith.select %320, %316, %220 : vector<8x32xf32>
    %322 = arith.select %320, %314, %221 : vector<8x32xf32>
    %323 = arith.sitofp %319 : i32 to f32
    %324 = vector.broadcast %323 : f32 to vector<8x1xf32>
    %325 = arith.cmpf ogt, %21, %324 : vector<8x1xf32>
    %cst_137 = arith.constant 0.000000e+00 : f32
    %326 = vector.shape_cast %325 : vector<8x1xi1> to vector<8x1xi1>
    %327 = vector.broadcast %326 : vector<8x1xi1> to vector<8x32xi1>
    %328 = vector.broadcast %cst_137 : f32 to vector<8x32xf32>
    %329 = arith.select %327, %321, %328 : vector<8x32xi1>, vector<8x32xf32>
    %330 = arith.addf %229, %329 : vector<8x32xf32>
    %c3_i32_138 = arith.constant 3 : i32
    %331 = arith.index_cast %c3_i32_138 : i32 to index
    %c0_139 = arith.constant 0 : index
    %c0_140 = arith.constant 0 : index
    %332 = vector.load %arg12[%331, %c0_139, %c0_140] : memref<4x8x128xf32, #tpu.memory_space<vmem>>, vector<1x8x128xf32>
    %333 = vector.shape_cast %332 : vector<1x8x128xf32> to vector<8x128xf32>
    %334 = arith.truncf %267 : vector<8x32xf32> to vector<8x32xbf16>
    %c0_141 = arith.constant 0 : index
    %c0_142 = arith.constant 0 : index
    %335 = vector.load %arg6[%c0_141, %c0_142] : memref<32x128xbf16, #tpu.memory_space<vmem>>, vector<32x128xbf16>
    %cst_143 = arith.constant dense<0.000000e+00> : vector<8x128xf32>
    %336 = tpu.matmul %334, %335, %cst_143 {dimension_numbers = #tpu.dot_dimension_numbers<[1], [0], [0], [1], [0, 0, 1, 1], [], []>} : vector<8x32xbf16>, vector<32x128xbf16>, vector<8x128xf32> -> vector<8x128xf32>
    %337 = arith.addf %333, %336 : vector<8x128xf32>
    %338 = vector.extract_strided_slice %337 {offsets = [0, 0], sizes = [8, 32], strides = [1, 1]} : vector<8x128xf32> to vector<8x32xf32>
    %cst_144 = arith.constant 5.000000e-01 : f32
    %339 = vector.broadcast %cst_144 : f32 to vector<8x32xf32>
    %340 = arith.mulf %339, %338 : vector<8x32xf32>
    %341 = math.tanh %340 : vector<8x32xf32>
    %cst_145 = arith.constant 5.000000e-01 : f32
    %342 = vector.broadcast %cst_145 : f32 to vector<8x32xf32>
    %343 = arith.mulf %342, %341 : vector<8x32xf32>
    %cst_146 = arith.constant 5.000000e-01 : f32
    %344 = vector.broadcast %cst_146 : f32 to vector<8x32xf32>
    %345 = arith.addf %343, %344 : vector<8x32xf32>
    %346 = vector.extract_strided_slice %337 {offsets = [0, 32], sizes = [8, 32], strides = [1, 1]} : vector<8x128xf32> to vector<8x32xf32>
    %cst_147 = arith.constant 5.000000e-01 : f32
    %347 = vector.broadcast %cst_147 : f32 to vector<8x32xf32>
    %348 = arith.mulf %347, %346 : vector<8x32xf32>
    %349 = math.tanh %348 : vector<8x32xf32>
    %cst_148 = arith.constant 5.000000e-01 : f32
    %350 = vector.broadcast %cst_148 : f32 to vector<8x32xf32>
    %351 = arith.mulf %350, %349 : vector<8x32xf32>
    %cst_149 = arith.constant 5.000000e-01 : f32
    %352 = vector.broadcast %cst_149 : f32 to vector<8x32xf32>
    %353 = arith.addf %351, %352 : vector<8x32xf32>
    %354 = vector.extract_strided_slice %337 {offsets = [0, 64], sizes = [8, 32], strides = [1, 1]} : vector<8x128xf32> to vector<8x32xf32>
    %355 = math.tanh %354 : vector<8x32xf32>
    %356 = vector.extract_strided_slice %337 {offsets = [0, 96], sizes = [8, 32], strides = [1, 1]} : vector<8x128xf32> to vector<8x32xf32>
    %cst_150 = arith.constant 5.000000e-01 : f32
    %357 = vector.broadcast %cst_150 : f32 to vector<8x32xf32>
    %358 = arith.mulf %357, %356 : vector<8x32xf32>
    %359 = math.tanh %358 : vector<8x32xf32>
    %cst_151 = arith.constant 5.000000e-01 : f32
    %360 = vector.broadcast %cst_151 : f32 to vector<8x32xf32>
    %361 = arith.mulf %360, %359 : vector<8x32xf32>
    %cst_152 = arith.constant 5.000000e-01 : f32
    %362 = vector.broadcast %cst_152 : f32 to vector<8x32xf32>
    %363 = arith.addf %361, %362 : vector<8x32xf32>
    %364 = arith.mulf %353, %265 : vector<8x32xf32>
    %365 = arith.mulf %345, %355 : vector<8x32xf32>
    %366 = arith.addf %364, %365 : vector<8x32xf32>
    %367 = math.tanh %366 : vector<8x32xf32>
    %368 = arith.mulf %363, %367 : vector<8x32xf32>
    %c4_i32_153 = arith.constant 4 : i32
    %369 = arith.muli %arg1, %c4_i32_153 : i32
    %370 = arith.addi %369, %c3_i32_138 : i32
    %371 = arith.sitofp %370 : i32 to f32
    %372 = vector.broadcast %371 : f32 to vector<8x1xf32>
    %373 = arith.cmpf ogt, %21, %372 : vector<8x1xf32>
    %cst_154 = arith.constant 0.000000e+00 : f32
    %374 = vector.shape_cast %373 : vector<8x1xi1> to vector<8x1xi1>
    %375 = vector.broadcast %374 : vector<8x1xi1> to vector<8x32xi1>
    %376 = vector.broadcast %cst_154 : f32 to vector<8x32xf32>
    %377 = arith.select %375, %368, %376 : vector<8x32xi1>, vector<8x32xf32>
    %378 = arith.addf %277, %377 : vector<8x32xf32>
    %c3_i32_155 = arith.constant 3 : i32
    %379 = arith.subi %c3_i32_155, %c3_i32_138 : i32
    %380 = arith.index_cast %379 : i32 to index
    %c0_156 = arith.constant 0 : index
    %c0_157 = arith.constant 0 : index
    %381 = vector.load %arg13[%380, %c0_156, %c0_157] : memref<4x8x128xf32, #tpu.memory_space<vmem>>, vector<1x8x128xf32>
    %382 = vector.shape_cast %381 : vector<1x8x128xf32> to vector<8x128xf32>
    %383 = arith.truncf %321 : vector<8x32xf32> to vector<8x32xbf16>
    %c0_158 = arith.constant 0 : index
    %c0_159 = arith.constant 0 : index
    %384 = vector.load %arg9[%c0_158, %c0_159] : memref<32x128xbf16, #tpu.memory_space<vmem>>, vector<32x128xbf16>
    %cst_160 = arith.constant dense<0.000000e+00> : vector<8x128xf32>
    %385 = tpu.matmul %383, %384, %cst_160 {dimension_numbers = #tpu.dot_dimension_numbers<[1], [0], [0], [1], [0, 0, 1, 1], [], []>} : vector<8x32xbf16>, vector<32x128xbf16>, vector<8x128xf32> -> vector<8x128xf32>
    %386 = arith.addf %382, %385 : vector<8x128xf32>
    %387 = vector.extract_strided_slice %386 {offsets = [0, 0], sizes = [8, 32], strides = [1, 1]} : vector<8x128xf32> to vector<8x32xf32>
    %cst_161 = arith.constant 5.000000e-01 : f32
    %388 = vector.broadcast %cst_161 : f32 to vector<8x32xf32>
    %389 = arith.mulf %388, %387 : vector<8x32xf32>
    %390 = math.tanh %389 : vector<8x32xf32>
    %cst_162 = arith.constant 5.000000e-01 : f32
    %391 = vector.broadcast %cst_162 : f32 to vector<8x32xf32>
    %392 = arith.mulf %391, %390 : vector<8x32xf32>
    %cst_163 = arith.constant 5.000000e-01 : f32
    %393 = vector.broadcast %cst_163 : f32 to vector<8x32xf32>
    %394 = arith.addf %392, %393 : vector<8x32xf32>
    %395 = vector.extract_strided_slice %386 {offsets = [0, 32], sizes = [8, 32], strides = [1, 1]} : vector<8x128xf32> to vector<8x32xf32>
    %cst_164 = arith.constant 5.000000e-01 : f32
    %396 = vector.broadcast %cst_164 : f32 to vector<8x32xf32>
    %397 = arith.mulf %396, %395 : vector<8x32xf32>
    %398 = math.tanh %397 : vector<8x32xf32>
    %cst_165 = arith.constant 5.000000e-01 : f32
    %399 = vector.broadcast %cst_165 : f32 to vector<8x32xf32>
    %400 = arith.mulf %399, %398 : vector<8x32xf32>
    %cst_166 = arith.constant 5.000000e-01 : f32
    %401 = vector.broadcast %cst_166 : f32 to vector<8x32xf32>
    %402 = arith.addf %400, %401 : vector<8x32xf32>
    %403 = vector.extract_strided_slice %386 {offsets = [0, 64], sizes = [8, 32], strides = [1, 1]} : vector<8x128xf32> to vector<8x32xf32>
    %404 = math.tanh %403 : vector<8x32xf32>
    %405 = vector.extract_strided_slice %386 {offsets = [0, 96], sizes = [8, 32], strides = [1, 1]} : vector<8x128xf32> to vector<8x32xf32>
    %cst_167 = arith.constant 5.000000e-01 : f32
    %406 = vector.broadcast %cst_167 : f32 to vector<8x32xf32>
    %407 = arith.mulf %406, %405 : vector<8x32xf32>
    %408 = math.tanh %407 : vector<8x32xf32>
    %cst_168 = arith.constant 5.000000e-01 : f32
    %409 = vector.broadcast %cst_168 : f32 to vector<8x32xf32>
    %410 = arith.mulf %409, %408 : vector<8x32xf32>
    %cst_169 = arith.constant 5.000000e-01 : f32
    %411 = vector.broadcast %cst_169 : f32 to vector<8x32xf32>
    %412 = arith.addf %410, %411 : vector<8x32xf32>
    %413 = arith.mulf %402, %322 : vector<8x32xf32>
    %414 = arith.mulf %394, %404 : vector<8x32xf32>
    %415 = arith.addf %413, %414 : vector<8x32xf32>
    %416 = math.tanh %415 : vector<8x32xf32>
    %417 = arith.mulf %412, %416 : vector<8x32xf32>
    %c2_i32_170 = arith.constant 2 : i32
    %418 = arith.subi %c2_i32_170, %arg1 : i32
    %c4_i32_171 = arith.constant 4 : i32
    %419 = arith.muli %418, %c4_i32_171 : i32
    %420 = arith.addi %419, %379 : i32
    %c9_i32_172 = arith.constant 9 : i32
    %421 = arith.cmpi slt, %420, %c9_i32_172 : i32
    %422 = arith.select %421, %417, %321 : vector<8x32xf32>
    %423 = arith.select %421, %415, %322 : vector<8x32xf32>
    %424 = arith.sitofp %420 : i32 to f32
    %425 = vector.broadcast %424 : f32 to vector<8x1xf32>
    %426 = arith.cmpf ogt, %21, %425 : vector<8x1xf32>
    %cst_173 = arith.constant 0.000000e+00 : f32
    %427 = vector.shape_cast %426 : vector<8x1xi1> to vector<8x1xi1>
    %428 = vector.broadcast %427 : vector<8x1xi1> to vector<8x32xi1>
    %429 = vector.broadcast %cst_173 : f32 to vector<8x32xf32>
    %430 = arith.select %428, %422, %429 : vector<8x32xi1>, vector<8x32xf32>
    %431 = arith.addf %330, %430 : vector<8x32xf32>
    %c4_i32_174 = arith.constant 4 : i32
    %c0_175 = arith.constant 0 : index
    %c0_176 = arith.constant 0 : index
    %432 = vector.load %arg14[%c0_175, %c0_176] : memref<8x32xf32, #tpu.memory_space<vmem>>, vector<8x32xf32>
    tpu.vector_store %arg14[%c0_175, %c0_176], %368 {strides = array<i32>} : memref<8x32xf32, #tpu.memory_space<vmem>>, vector<8x32xf32>,
    %c0_177 = arith.constant 0 : index
    %c0_178 = arith.constant 0 : index
    %433 = vector.load %arg15[%c0_177, %c0_178] : memref<8x32xf32, #tpu.memory_space<vmem>>, vector<8x32xf32>
    tpu.vector_store %arg15[%c0_177, %c0_178], %366 {strides = array<i32>} : memref<8x32xf32, #tpu.memory_space<vmem>>, vector<8x32xf32>,
    %c0_179 = arith.constant 0 : index
    %c0_180 = arith.constant 0 : index
    %434 = vector.load %arg16[%c0_179, %c0_180] : memref<8x32xf32, #tpu.memory_space<vmem>>, vector<8x32xf32>
    tpu.vector_store %arg16[%c0_179, %c0_180], %422 {strides = array<i32>} : memref<8x32xf32, #tpu.memory_space<vmem>>, vector<8x32xf32>,
    %c0_181 = arith.constant 0 : index
    %c0_182 = arith.constant 0 : index
    %435 = vector.load %arg17[%c0_181, %c0_182] : memref<8x32xf32, #tpu.memory_space<vmem>>, vector<8x32xf32>
    tpu.vector_store %arg17[%c0_181, %c0_182], %423 {strides = array<i32>} : memref<8x32xf32, #tpu.memory_space<vmem>>, vector<8x32xf32>,
    %c0_183 = arith.constant 0 : index
    %c0_184 = arith.constant 0 : index
    %436 = vector.load %arg18[%c0_183, %c0_184] : memref<8x32xf32, #tpu.memory_space<vmem>>, vector<8x32xf32>
    tpu.vector_store %arg18[%c0_183, %c0_184], %378 {strides = array<i32>} : memref<8x32xf32, #tpu.memory_space<vmem>>, vector<8x32xf32>,
    %c0_185 = arith.constant 0 : index
    %c0_186 = arith.constant 0 : index
    %437 = vector.load %arg19[%c0_185, %c0_186] : memref<8x32xf32, #tpu.memory_space<vmem>>, vector<8x32xf32>
    tpu.vector_store %arg19[%c0_185, %c0_186], %431 {strides = array<i32>} : memref<8x32xf32, #tpu.memory_space<vmem>>, vector<8x32xf32>,
    %c2_i32_187 = arith.constant 2 : i32
    %438 = arith.cmpi eq, %arg1, %c2_i32_187 : i32
    %439 = arith.extui %438 : i1 to i32
    %c0_i32_188 = arith.constant 0 : i32
    %440 = arith.cmpi ne, %439, %c0_i32_188 : i32
    scf.if %440 {
      %cst_189 = arith.constant 1.000000e+00 : f32
      %441 = vector.broadcast %cst_189 : f32 to vector<8x1xf32>
      %442 = arith.maximumf %21, %441 : vector<8x1xf32>
      %443 = vector.broadcast %442 : vector<8x1xf32> to vector<8x32xf32>
      %444 = arith.divf %378, %443 : vector<8x32xf32>
      %c0_190 = arith.constant 0 : index
      %c0_191 = arith.constant 0 : index
      %445 = vector.load %arg11[%c0_190, %c0_191] : memref<8x64xf32, #tpu.memory_space<vmem>>, vector<8x32xf32>
      tpu.vector_store %arg11[%c0_190, %c0_191], %444 {strides = array<i32>} : memref<8x64xf32, #tpu.memory_space<vmem>>, vector<8x32xf32>,
      %446 = vector.broadcast %442 : vector<8x1xf32> to vector<8x32xf32>
      %447 = arith.divf %431, %446 : vector<8x32xf32>
      %c0_192 = arith.constant 0 : index
      %c32 = arith.constant 32 : index
      %448 = vector.load %arg11[%c0_192, %c32] : memref<8x64xf32, #tpu.memory_space<vmem>>, vector<8x32xf32>
      tpu.vector_store %arg11[%c0_192, %c32], %447 {strides = array<i32>} : memref<8x64xf32, #tpu.memory_space<vmem>>, vector<8x32xf32>,
    } else {
    }
    return
  }
  func.func @transform_0(%arg0: i32, %arg1: i32) -> (i32, i32, i32) {
    %c0_i32 = arith.constant 0 : i32
    %c0_i32_0 = arith.constant 0 : i32
    return %arg1, %arg0, %c0_i32 : i32, i32, i32
  }
  func.func @transform_1(%arg0: i32, %arg1: i32) -> (i32, i32, i32) {
    %c2_i32 = arith.constant 2 : i32
    %0 = arith.subi %c2_i32, %arg1 : i32
    %c0_i32 = arith.constant 0 : i32
    %c0_i32_0 = arith.constant 0 : i32
    return %0, %arg0, %c0_i32 : i32, i32, i32
  }
  func.func @transform_2(%arg0: i32, %arg1: i32) -> (i32, i32) {
    %c0_i32 = arith.constant 0 : i32
    %c0_i32_0 = arith.constant 0 : i32
    return %arg0, %c0_i32 : i32, i32
  }
  func.func @transform_3(%arg0: i32, %arg1: i32) -> (i32, i32) {
    %c0_i32 = arith.constant 0 : i32
    %c0_i32_0 = arith.constant 0 : i32
    %c0_i32_1 = arith.constant 0 : i32
    return %c0_i32, %c0_i32_0 : i32, i32
  }
  func.func @transform_4(%arg0: i32, %arg1: i32) -> (i32, i32) {
    %c0_i32 = arith.constant 0 : i32
    %c0_i32_0 = arith.constant 0 : i32
    %c0_i32_1 = arith.constant 0 : i32
    return %c0_i32, %c0_i32_0 : i32, i32
  }
  func.func @transform_5(%arg0: i32, %arg1: i32) -> (i32, i32) {
    %c0_i32 = arith.constant 0 : i32
    %c0_i32_0 = arith.constant 0 : i32
    %c0_i32_1 = arith.constant 0 : i32
    return %c0_i32, %c0_i32_0 : i32, i32
  }
  func.func @transform_6(%arg0: i32, %arg1: i32) -> (i32, i32) {
    %c0_i32 = arith.constant 0 : i32
    %c0_i32_0 = arith.constant 0 : i32
    %c0_i32_1 = arith.constant 0 : i32
    return %c0_i32, %c0_i32_0 : i32, i32
  }
  func.func @transform_7(%arg0: i32, %arg1: i32) -> (i32, i32) {
    %c0_i32 = arith.constant 0 : i32
    %c0_i32_0 = arith.constant 0 : i32
    %c0_i32_1 = arith.constant 0 : i32
    return %c0_i32, %c0_i32_0 : i32, i32
  }
  func.func @transform_8(%arg0: i32, %arg1: i32) -> (i32, i32) {
    %c0_i32 = arith.constant 0 : i32
    %c0_i32_0 = arith.constant 0 : i32
    %c0_i32_1 = arith.constant 0 : i32
    return %c0_i32, %c0_i32_0 : i32, i32
  }
  func.func @transform_9(%arg0: i32, %arg1: i32) -> (i32, i32) {
    %c0_i32 = arith.constant 0 : i32
    %c0_i32_0 = arith.constant 0 : i32
    return %arg0, %c0_i32 : i32, i32
  }
}

</mosaic_0001>

<llo_original>
// kernel: tpu_custom_call.1
$region0: #{tpu_custom_call.1}
  #allocation0 [shape = 'u32[]', space=smem, size = 0x4, offset = 0x4, fixed_abs, tag = 'smem constant byte address 0x4 - core index']
  #allocation1 [shape = 'u32[72,128]{1,0:T(1,128)}', space=vmem, size = 0x9000, scoped, tag = 'internal scratch']
  #allocation2 [shape = 'f32[4,8,128]{2,1,0:T(8,128)}', space=vmem, size = 0x4000, scoped, tag = 'scratch operand']
  #allocation3 [shape = 'f32[4,8,128]{2,1,0:T(8,128)}', space=vmem, size = 0x4000, scoped, tag = 'scratch operand']
  #allocation4 [shape = 'f32[8,32]{1,0:T(8,128)}', space=vmem, size = 0x1000, scoped, tag = 'scratch operand']
  #allocation5 [shape = 'f32[8,32]{1,0:T(8,128)}', space=vmem, size = 0x1000, scoped, tag = 'scratch operand']
  #allocation6 [shape = 'f32[8,32]{1,0:T(8,128)}', space=vmem, size = 0x1000, scoped, tag = 'scratch operand']
  #allocation7 [shape = 'f32[8,32]{1,0:T(8,128)}', space=vmem, size = 0x1000, scoped, tag = 'scratch operand']
  #allocation8 [shape = 'f32[8,32]{1,0:T(8,128)}', space=vmem, size = 0x1000, scoped, tag = 'scratch operand']
  #allocation9 [shape = 'f32[8,32]{1,0:T(8,128)}', space=vmem, size = 0x1000, scoped, tag = 'scratch operand']
  %s0 = inlined_call_operand.hbm [shape: bf16[12,8,32], index: 0, kind: input, shape index: {}]
  %s1 = inlined_call_operand.hbm [shape: bf16[12,8,32], index: 1, kind: input, shape index: {}]
  %s2 = inlined_call_operand.vmem [shape: f32[8,1], index: 2, kind: input, shape index: {}]
  %s3 = inlined_call_operand.hbm [shape: bf16[32,128], index: 3, kind: input, shape index: {}]
  %s4 = inlined_call_operand.hbm [shape: bf16[32,128], index: 4, kind: input, shape index: {}]
  %s5 = inlined_call_operand.vmem [shape: f32[1,128], index: 5, kind: input, shape index: {}]
  %s6 = inlined_call_operand.hbm [shape: bf16[32,128], index: 6, kind: input, shape index: {}]
  %s7 = inlined_call_operand.hbm [shape: bf16[32,128], index: 7, kind: input, shape index: {}]
  %s8 = inlined_call_operand.vmem [shape: f32[1,128], index: 8, kind: input, shape index: {}]
  %s9 = inlined_call_operand.hbm [shape: f32[8,64], index: 9, kind: output, shape index: {}]
  %s10 = sld [smem:[#allocation0]]
  $region101: #{tpu_custom_call.1} parent=0
    _
  %s12 = ssub.s32 1, %s10
  %s13 = scalar_select 0, %s12, %s10
  $region1: #{tpu_custom_call.1} parent=0
    #allocation10 [shape = 'u8[16384]{0}', space=vmem, size = 0x4000, scoped, tag = 'input window, operand 0']
    #allocation11 [shape = 's32[2]{0}', space=sflag, size = 0x8, scoped, tag = 'scoped memory for tpu_custom_call.1']
    #allocation12 [shape = 's32[2]{0}', space=sflag, size = 0x8, scoped, tag = 'scoped memory for tpu_custom_call.1']
    #allocation13 [shape = 'u8[16384]{0}', space=vmem, size = 0x4000, scoped, tag = 'input window, operand 1']
    #allocation14 [shape = 's32[2]{0}', space=sflag, size = 0x8, scoped, tag = 'scoped memory for tpu_custom_call.1']
    #allocation15 [shape = 'u8[8192]{0}', space=vmem, size = 0x2000, scoped, tag = 'input window, operand 3, single buffered']
    #allocation16 [shape = 'u8[8192]{0}', space=vmem, size = 0x2000, scoped, tag = 'input window, operand 4, single buffered']
    #allocation17 [shape = 's32[1]{0}', space=sflag, size = 0x4, scoped, tag = 'scoped memory for tpu_custom_call.1']
    #allocation18 [shape = 'u8[8192]{0}', space=vmem, size = 0x2000, scoped, tag = 'input window, operand 6, single buffered']
    #allocation19 [shape = 'u8[8192]{0}', space=vmem, size = 0x2000, scoped, tag = 'input window, operand 7, single buffered']
    #allocation20 [shape = 's32[1]{0}', space=sflag, size = 0x4, scoped, tag = 'scoped memory for tpu_custom_call.1']
    #allocation21 [shape = 'u8[4096]{0}', space=vmem, size = 0x1000, scoped, tag = 'output window, operand 0, single buffered']
    %14 = vsyncpa [#allocation11], 0
    %s15 = scalar_lea.sflag [#allocation11], 1
    %16 = vsyncpa %s15, 0
    %17 = vsyncpa [#allocation14], 0
    %s18 = scalar_lea.sflag [#allocation14], 1
    %19 = vsyncpa %s18, 0
    %20 = vsyncpa [#allocation17], 0
    %21 = vsyncpa [#allocation20], 0
    %22 = vsyncpa [#allocation12], 0
    loop: start=0, step=1, limit=5
    $region2: #{tpu_custom_call.1} parent=1 // loop_pre_header
      _
    $region3: #{tpu_custom_call.1} parent=1 // loop_header
      %s24 = sphi 0, %s28
      %p25 = scmp.ge.s32.totalorder %s24, 5
      %s31 = sphi 0, %s43
      %s32 = sphi 0, %s39
      %s33 = sphi 0, %s31
      %s34 = sphi 0, %s32
      %s35 = sphi 0, %s33
      %s36 = sphi 0, %s34
      %s48 = sphi 0, %s50
      %s51 = sphi 0, %s48
      %s52 = sphi 0, %s51
      %s68 = sphi 0, %s52
      %s78 = sphi 0, %s80
      %s81 = sphi 0, %s78
      %s82 = sphi 0, %s81
      %s98 = sphi 0, %s82
      %s104 = sphi 0, %s106
      %s107 = sphi 0, %s104
      %s108 = sphi 0, %s107
      %s124 = sphi 0, %s108
      %s128 = sphi 0, %s128
      %s130 = sphi 0, %s128
      %s131 = sphi 0, %s130
      %s145 = sphi 0, %s131
      %s149 = sphi 0, %s149
      %s151 = sphi 0, %s149
      %s152 = sphi 0, %s151
      %s166 = sphi 0, %s152
      %s170 = sphi 0, %s170
      %s172 = sphi 0, %s170
      %s173 = sphi 0, %s172
      %s187 = sphi 0, %s173
      %s191 = sphi 0, %s191
      %s193 = sphi 0, %s191
      %s194 = sphi 0, %s193
      %s208 = sphi 0, %s194
      %s212 = sphi 0, %s212
      %s214 = sphi 0, %s212
      %s215 = sphi 0, %s214
      %s229 = sphi 0, %s215
      %s233 = sphi 0, %s233
      %s235 = sphi 0, %s233
      %s236 = sphi 0, %s235
      %s250 = sphi 0, %s236
      %s256 = sphi 0, %s258
      %s259 = sphi 0, %s256
      %s260 = sphi 0, %s259
      %s276 = sphi 0, %s260
    $region4: #{tpu_custom_call.1} parent=1 // loop_header_branch
      %27 = sbr.rel (%p25) target = $region8
    $region5: #{tpu_custom_call.1} parent=1 // loop_body
      %s29 = ssub.s32 %s24, 1
      %s30 = ssub.s32 %s24, 2
      %s37 = sadd.s32 1, %s32
      %p38 = scmp.ge.s32.totalorder %s37, 3
      %s39 = scalar_select %p38, 0, %s37
      %s40 = sadd.s32 1, %s31
      %s41 = scalar_select %p38, %s40, %s31
      %p42 = scmp.ge.s32.totalorder %s41, 1
      %s43 = scalar_select %p42, 0, %s41
      %s44 = ssub.s32 %s32, %s39
      %s45 = ssub.s32 %s31, %s43
      %s46 = sor.u32 %s44, %s45
      %p47 = scmp.eq.s32.totalorder %s46, 0
      %s49 = sadd.s32 %s48, 1
      %s50 = scalar_select %p47, %s48, %s49
      %p53 = pneg %p47
      %p54 = scmp.eq.s32.totalorder %s24, 2
      %p55 = por %p53, %p54
      %p56 = scmp.ne.s32.totalorder %s48, %s51
      %p57 = scmp.eq.s32.totalorder %s24, 0
      %p58 = por %p56, %p57
      %p59 = scmp.ne.s32.totalorder %s48, %s51
      %p60 = scmp.eq.s32.totalorder %s29, 2
      %p61 = por %p59, %p60
      %p62 = scmp.ne.s32.totalorder %s51, %s52
      %p63 = scmp.eq.s32.totalorder %s29, 0
      %p64 = por %p62, %p63
      %p65 = scmp.ne.s32.totalorder %s51, %s52
      %p66 = scmp.eq.s32.totalorder %s30, 2
      %p67 = por %p65, %p66
      %p69 = scmp.ne.s32.totalorder %s52, %s68
      %p70 = scmp.eq.s32.totalorder %s30, 0
      %p71 = por %p69, %p70
      %s72 = ssub.s32 2, %s32
      %s73 = ssub.s32 2, %s39
      %s74 = ssub.s32 %s72, %s73
      %s75 = ssub.s32 %s31, %s43
      %s76 = sor.u32 %s74, %s75
      %p77 = scmp.eq.s32.totalorder %s76, 0
      %s79 = sadd.s32 %s78, 1
      %s80 = scalar_select %p77, %s78, %s79
      %p83 = pneg %p77
      %p84 = scmp.eq.s32.totalorder %s24, 2
      %p85 = por %p83, %p84
      %p86 = scmp.ne.s32.totalorder %s78, %s81
      %p87 = scmp.eq.s32.totalorder %s24, 0
      %p88 = por %p86, %p87
      %p89 = scmp.ne.s32.totalorder %s78, %s81
      %p90 = scmp.eq.s32.totalorder %s29, 2
      %p91 = por %p89, %p90
      %p92 = scmp.ne.s32.totalorder %s81, %s82
      %p93 = scmp.eq.s32.totalorder %s29, 0
      %p94 = por %p92, %p93
      %p95 = scmp.ne.s32.totalorder %s81, %s82
      %p96 = scmp.eq.s32.totalorder %s30, 2
      %p97 = por %p95, %p96
      %p99 = scmp.ne.s32.totalorder %s82, %s98
      %p100 = scmp.eq.s32.totalorder %s30, 0
      %p101 = por %p99, %p100
      %s102 = ssub.s32 %s31, %s43
      %p103 = scmp.eq.s32.totalorder %s102, 0
      %s105 = sadd.s32 %s104, 1
      %s106 = scalar_select %p103, %s104, %s105
      %p109 = pneg %p103
      %p110 = scmp.eq.s32.totalorder %s24, 2
      %p111 = por %p109, %p110
      %p112 = scmp.ne.s32.totalorder %s104, %s107
      %p113 = scmp.eq.s32.totalorder %s24, 0
      %p114 = por %p112, %p113
      %p115 = scmp.ne.s32.totalorder %s104, %s107
      %p116 = scmp.eq.s32.totalorder %s29, 2
      %p117 = por %p115, %p116
      %p118 = scmp.ne.s32.totalorder %s107, %s108
      %p119 = scmp.eq.s32.totalorder %s29, 0
      %p120 = por %p118, %p119
      %p121 = scmp.ne.s32.totalorder %s107, %s108
      %p122 = scmp.eq.s32.totalorder %s30, 2
      %p123 = por %p121, %p122
      %p125 = scmp.ne.s32.totalorder %s108, %s124
      %p126 = scmp.eq.s32.totalorder %s30, 0
      %p127 = por %p125, %p126
      %s129 = sadd.s32 %s128, 1
      %p132 = scmp.eq.s32.totalorder %s24, 2
      %p133 = scmp.ne.s32.totalorder %s128, %s130
      %p134 = scmp.eq.s32.totalorder %s24, 0
      %p135 = por %p133, %p134
      %p136 = scmp.ne.s32.totalorder %s128, %s130
      %p137 = scmp.eq.s32.totalorder %s29, 2
      %p138 = por %p136, %p137
      %p139 = scmp.ne.s32.totalorder %s130, %s131
      %p140 = scmp.eq.s32.totalorder %s29, 0
      %p141 = por %p139, %p140
      %p142 = scmp.ne.s32.totalorder %s130, %s131
      %p143 = scmp.eq.s32.totalorder %s30, 2
      %p144 = por %p142, %p143
      %p146 = scmp.ne.s32.totalorder %s131, %s145
      %p147 = scmp.eq.s32.totalorder %s30, 0
      %p148 = por %p146, %p147
      %s150 = sadd.s32 %s149, 1
      %p153 = scmp.eq.s32.totalorder %s24, 2
      %p154 = scmp.ne.s32.totalorder %s149, %s151
      %p155 = scmp.eq.s32.totalorder %s24, 0
      %p156 = por %p154, %p155
      %p157 = scmp.ne.s32.totalorder %s149, %s151
      %p158 = scmp.eq.s32.totalorder %s29, 2
      %p159 = por %p157, %p158
      %p160 = scmp.ne.s32.totalorder %s151, %s152
      %p161 = scmp.eq.s32.totalorder %s29, 0
      %p162 = por %p160, %p161
      %p163 = scmp.ne.s32.totalorder %s151, %s152
      %p164 = scmp.eq.s32.totalorder %s30, 2
      %p165 = por %p163, %p164
      %p167 = scmp.ne.s32.totalorder %s152, %s166
      %p168 = scmp.eq.s32.totalorder %s30, 0
      %p169 = por %p167, %p168
      %s171 = sadd.s32 %s170, 1
      %p174 = scmp.eq.s32.totalorder %s24, 2
      %p175 = scmp.ne.s32.totalorder %s170, %s172
      %p176 = scmp.eq.s32.totalorder %s24, 0
      %p177 = por %p175, %p176
      %p178 = scmp.ne.s32.totalorder %s170, %s172
      %p179 = scmp.eq.s32.totalorder %s29, 2
      %p180 = por %p178, %p179
      %p181 = scmp.ne.s32.totalorder %s172, %s173
      %p182 = scmp.eq.s32.totalorder %s29, 0
      %p183 = por %p181, %p182
      %p184 = scmp.ne.s32.totalorder %s172, %s173
      %p185 = scmp.eq.s32.totalorder %s30, 2
      %p186 = por %p184, %p185
      %p188 = scmp.ne.s32.totalorder %s173, %s187
      %p189 = scmp.eq.s32.totalorder %s30, 0
      %p190 = por %p188, %p189
      %s192 = sadd.s32 %s191, 1
      %p195 = scmp.eq.s32.totalorder %s24, 2
      %p196 = scmp.ne.s32.totalorder %s191, %s193
      %p197 = scmp.eq.s32.totalorder %s24, 0
      %p198 = por %p196, %p197
      %p199 = scmp.ne.s32.totalorder %s191, %s193
      %p200 = scmp.eq.s32.totalorder %s29, 2
      %p201 = por %p199, %p200
      %p202 = scmp.ne.s32.totalorder %s193, %s194
      %p203 = scmp.eq.s32.totalorder %s29, 0
      %p204 = por %p202, %p203
      %p205 = scmp.ne.s32.totalorder %s193, %s194
      %p206 = scmp.eq.s32.totalorder %s30, 2
      %p207 = por %p205, %p206
      %p209 = scmp.ne.s32.totalorder %s194, %s208
      %p210 = scmp.eq.s32.totalorder %s30, 0
      %p211 = por %p209, %p210
      %s213 = sadd.s32 %s212, 1
      %p216 = scmp.eq.s32.totalorder %s24, 2
      %p217 = scmp.ne.s32.totalorder %s212, %s214
      %p218 = scmp.eq.s32.totalorder %s24, 0
      %p219 = por %p217, %p218
      %p220 = scmp.ne.s32.totalorder %s212, %s214
      %p221 = scmp.eq.s32.totalorder %s29, 2
      %p222 = por %p220, %p221
      %p223 = scmp.ne.s32.totalorder %s214, %s215
      %p224 = scmp.eq.s32.totalorder %s29, 0
      %p225 = por %p223, %p224
      %p226 = scmp.ne.s32.totalorder %s214, %s215
      %p227 = scmp.eq.s32.totalorder %s30, 2
      %p228 = por %p226, %p227
      %p230 = scmp.ne.s32.totalorder %s215, %s229
      %p231 = scmp.eq.s32.totalorder %s30, 0
      %p232 = por %p230, %p231
      %s234 = sadd.s32 %s233, 1
      %p237 = scmp.eq.s32.totalorder %s24, 2
      %p238 = scmp.ne.s32.totalorder %s233, %s235
      %p239 = scmp.eq.s32.totalorder %s24, 0
      %p240 = por %p238, %p239
      %p241 = scmp.ne.s32.totalorder %s233, %s235
      %p242 = scmp.eq.s32.totalorder %s29, 2
      %p243 = por %p241, %p242
      %p244 = scmp.ne.s32.totalorder %s235, %s236
      %p245 = scmp.eq.s32.totalorder %s29, 0
      %p246 = por %p244, %p245
      %p247 = scmp.ne.s32.totalorder %s235, %s236
      %p248 = scmp.eq.s32.totalorder %s30, 2
      %p249 = por %p247, %p248
      %p251 = scmp.ne.s32.totalorder %s236, %s250
      %p252 = scmp.eq.s32.totalorder %s30, 0
      %p253 = por %p251, %p252
      %s254 = ssub.s32 %s31, %s43
      %p255 = scmp.eq.s32.totalorder %s254, 0
      %s257 = sadd.s32 %s256, 1
      %s258 = scalar_select %p255, %s256, %s257
      %p261 = pneg %p255
      %p262 = scmp.eq.s32.totalorder %s24, 2
      %p263 = por %p261, %p262
      %p264 = scmp.ne.s32.totalorder %s256, %s259
      %p265 = scmp.eq.s32.totalorder %s24, 0
      %p266 = por %p264, %p265
      %p267 = scmp.ne.s32.totalorder %s256, %s259
      %p268 = scmp.eq.s32.totalorder %s29, 2
      %p269 = por %p267, %p268
      %p270 = scmp.ne.s32.totalorder %s259, %s260
      %p271 = scmp.eq.s32.totalorder %s29, 0
      %p272 = por %p270, %p271
      %p273 = scmp.ne.s32.totalorder %s259, %s260
      %p274 = scmp.eq.s32.totalorder %s30, 2
      %p275 = por %p273, %p274
      %p277 = scmp.ne.s32.totalorder %s260, %s276
      %p278 = scmp.eq.s32.totalorder %s30, 0
      %p279 = por %p277, %p278
      %p280 = scmp.le.s32.totalorder 1, %s24
      %p281 = scmp.lt.s32.totalorder %s24, 4
      %p282 = pnand %p280, %p281
      %p283 = pneg %p282
      // Predicated region
      $region9: #{tpu_custom_call.1} parent=5 // pred_check
        _
      $region10: #{tpu_custom_call.1} parent=5 // pred_check_branch
        %285 = sbr.rel (%p282) target = $region12
      $region11: #{tpu_custom_call.1} parent=5 // pred_region
        %s286 = ssub.s32 %s24, 1
        // Predicated region
        $region13: #{tpu_custom_call.1} parent=11 // pred_check
          %p287 = pneg %p120
        $region14: #{tpu_custom_call.1} parent=11 // pred_check_branch
          %289 = sbr.rel (%p287) target = $region16
        $region15: #{tpu_custom_call.1} parent=11 // pred_region
          %p290 = scmp.lt.s32.totalorder %s33, 0
          %s291 = scalar_select %p290, %s33, 0
          %s292 = smul.addr %s291, 8
          %s293 = scalar_lea.vmem %s2, %s292
        $region16: #{tpu_custom_call.1} parent=11 // pred_fallthru
          _
        // Predicated region
        $region17: #{tpu_custom_call.1} parent=11 // pred_check
          %p294 = pneg %p141
        $region18: #{tpu_custom_call.1} parent=11 // pred_check_branch
          %296 = sbr.rel (%p294) target = $region20
        $region19: #{tpu_custom_call.1} parent=11 // pred_region
          %298 = vsyncadd [#allocation14], 0
          %s299 = sshll.u32 %s3, 4
          %s300 = int_to_ptr.hbm [resolvable:$true] %s299
          %s301 = sshll.u32 [#allocation15], 4
          %s302 = int_to_ptr.vmem [resolvable:$true] %s301
          %307 = dma.hbm_to_vmem [thread:$0]  %s300, 256, %s302, [#allocation14], 64, 64, 4
        $region20: #{tpu_custom_call.1} parent=11 // pred_fallthru
          _
        // Predicated region
        $region21: #{tpu_custom_call.1} parent=11 // pred_check
          %p308 = pneg %p162
        $region22: #{tpu_custom_call.1} parent=11 // pred_check_branch
          %310 = sbr.rel (%p308) target = $region24
        $region23: #{tpu_custom_call.1} parent=11 // pred_region
          %312 = vsyncadd [#allocation17], 0
          %s313 = sshll.u32 %s4, 4
          %s314 = int_to_ptr.hbm [resolvable:$true] %s313
          %s315 = sshll.u32 [#allocation16], 4
          %s316 = int_to_ptr.vmem [resolvable:$true] %s315
          %321 = dma.hbm_to_vmem [thread:$0]  %s314, 256, %s316, [#allocation17], 64, 64, 4
        $region24: #{tpu_custom_call.1} parent=11 // pred_fallthru
          _
        // Predicated region
        $region25: #{tpu_custom_call.1} parent=11 // pred_check
          %p322 = pneg %p183
        $region26: #{tpu_custom_call.1} parent=11 // pred_check_branch
          %324 = sbr.rel (%p322) target = $region28
        $region27: #{tpu_custom_call.1} parent=11 // pred_region
          _
        $region28: #{tpu_custom_call.1} parent=11 // pred_fallthru
          _
        // Predicated region
        $region29: #{tpu_custom_call.1} parent=11 // pred_check
          %p325 = pneg %p204
        $region30: #{tpu_custom_call.1} parent=11 // pred_check_branch
          %327 = sbr.rel (%p325) target = $region32
        $region31: #{tpu_custom_call.1} parent=11 // pred_region
          %329 = vsyncadd [#allocation17], 0
          %s330 = sshll.u32 %s6, 4
          %s331 = int_to_ptr.hbm [resolvable:$true] %s330
          %s332 = sshll.u32 [#allocation18], 4
          %s333 = int_to_ptr.vmem [resolvable:$true] %s332
          %338 = dma.hbm_to_vmem [thread:$0]  %s331, 256, %s333, [#allocation17], 64, 64, 4
        $region32: #{tpu_custom_call.1} parent=11 // pred_fallthru
          _
        // Predicated region
        $region33: #{tpu_custom_call.1} parent=11 // pred_check
          %p339 = pneg %p225
        $region34: #{tpu_custom_call.1} parent=11 // pred_check_branch
          %341 = sbr.rel (%p339) target = $region36
        $region35: #{tpu_custom_call.1} parent=11 // pred_region
          %343 = vsyncadd [#allocation20], 0
          %s344 = sshll.u32 %s7, 4
          %s345 = int_to_ptr.hbm [resolvable:$true] %s344
          %s346 = sshll.u32 [#allocation19], 4
          %s347 = int_to_ptr.vmem [resolvable:$true] %s346
          %352 = dma.hbm_to_vmem [thread:$0]  %s345, 256, %s347, [#allocation20], 64, 64, 4
        $region36: #{tpu_custom_call.1} parent=11 // pred_fallthru
          _
        // Predicated region
        $region37: #{tpu_custom_call.1} parent=11 // pred_check
          %p353 = pneg %p246
        $region38: #{tpu_custom_call.1} parent=11 // pred_check_branch
          %355 = sbr.rel (%p353) target = $region40
        $region39: #{tpu_custom_call.1} parent=11 // pred_region
          _
        $region40: #{tpu_custom_call.1} parent=11 // pred_fallthru
          _
      $region12: #{tpu_custom_call.1} parent=5 // pred_fallthru
        _
      %p356 = scmp.lt.s32.totalorder %s24, 3
      // Predicated region
      $region41: #{tpu_custom_call.1} parent=5 // pred_check
        %p357 = pneg %p356
      $region42: #{tpu_custom_call.1} parent=5 // pred_check_branch
        %359 = sbr.rel (%p357) target = $region44
      $region43: #{tpu_custom_call.1} parent=5 // pred_region
        // Predicated region
        $region45: #{tpu_custom_call.1} parent=43 // pred_check
          %p360 = pneg %p58
        $region46: #{tpu_custom_call.1} parent=43 // pred_check_branch
          %362 = sbr.rel (%p360) target = $region48
        $region47: #{tpu_custom_call.1} parent=43 // pred_region
          %s363 = sand.u32 %s48, 1
          %s364 = scalar_lea.sflag [#allocation11], %s363
          %s365 = sand.u32 %s48, 1
          %s366 = smul.addr %s365, 16
          %s367 = scalar_lea.vmem [#allocation10], %s366
          %s368 = smul.u32 4, %s32
          %370 = vsyncadd %s364, 0
          %s371 = sadd.s32 %s31, %s368
          %s372 = smul.addr %s371, 4
          %s373 = scalar_lea.hbm %s0, %s372
          %s374 = sshll.u32 %s373, 4
          %s375 = int_to_ptr.hbm [resolvable:$true] %s374
          %s376 = sshll.u32 %s367, 4
          %s377 = int_to_ptr.vmem [resolvable:$true] %s376
          %382 = dma.hbm_to_vmem [thread:$0]  %s375, 256, %s377, %s364, 64, 64, 4
        $region48: #{tpu_custom_call.1} parent=43 // pred_fallthru
          _
        // Predicated region
        $region49: #{tpu_custom_call.1} parent=43 // pred_check
          %p383 = pneg %p88
        $region50: #{tpu_custom_call.1} parent=43 // pred_check_branch
          %385 = sbr.rel (%p383) target = $region52
        $region51: #{tpu_custom_call.1} parent=43 // pred_region
          %s386 = sand.u32 %s24, 1
          %s387 = scalar_lea.sflag [#allocation14], %s386
          %s388 = sand.u32 %s78, 1
          %s389 = smul.addr %s388, 16
          %s390 = scalar_lea.vmem [#allocation13], %s389
          %s391 = ssub.s32 2, %s32
          %s392 = smul.u32 4, %s391
          %394 = vsyncadd %s387, 0
          %s395 = sadd.s32 %s31, %s392
          %s396 = smul.addr %s395, 4
          %s397 = scalar_lea.hbm %s1, %s396
          %s398 = sshll.u32 %s397, 4
          %s399 = int_to_ptr.hbm [resolvable:$true] %s398
          %s400 = sshll.u32 %s390, 4
          %s401 = int_to_ptr.vmem [resolvable:$true] %s400
          %406 = dma.hbm_to_vmem [thread:$0]  %s399, 256, %s401, %s387, 64, 64, 4
        $region52: #{tpu_custom_call.1} parent=43 // pred_fallthru
          _
      $region44: #{tpu_custom_call.1} parent=5 // pred_fallthru
        _
      %p407 = scmp.le.s32.totalorder 1, %s24
      %p408 = scmp.lt.s32.totalorder %s24, 4
      %p409 = pnand %p407, %p408
      %p410 = pneg %p409
      // Predicated region
      $region53: #{tpu_custom_call.1} parent=5 // pred_check
        _
      $region54: #{tpu_custom_call.1} parent=5 // pred_check_branch
        %412 = sbr.rel (%p409) target = $region56
      $region55: #{tpu_custom_call.1} parent=5 // pred_region
        %s413 = ssub.s32 %s24, 1
        %s414 = sand.u32 %s51, 1
        %s415 = scalar_lea.sflag [#allocation11], %s414
        %s416 = sand.u32 %s51, 1
        %s417 = smul.addr %s416, 16
        %s418 = scalar_lea.vmem [#allocation10], %s417
        // Predicated region
        $region57: #{tpu_custom_call.1} parent=55 // pred_check
          %p419 = pneg %p64
        $region58: #{tpu_custom_call.1} parent=55 // pred_check_branch
          %421 = sbr.rel (%p419) target = $region60
        $region59: #{tpu_custom_call.1} parent=55 // pred_region
          %423 = dma.done %s415, 256
        $region60: #{tpu_custom_call.1} parent=55 // pred_fallthru
          _
        %s424 = sand.u32 %s29, 1
        %s425 = scalar_lea.sflag [#allocation14], %s424
        %s426 = sand.u32 %s81, 1
        %s427 = smul.addr %s426, 16
        %s428 = scalar_lea.vmem [#allocation13], %s427
        // Predicated region
        $region61: #{tpu_custom_call.1} parent=55 // pred_check
          %p429 = pneg %p94
        $region62: #{tpu_custom_call.1} parent=55 // pred_check_branch
          %431 = sbr.rel (%p429) target = $region64
        $region63: #{tpu_custom_call.1} parent=55 // pred_region
          %433 = dma.done %s425, 256
        $region64: #{tpu_custom_call.1} parent=55 // pred_fallthru
          _
        // Predicated region
        $region65: #{tpu_custom_call.1} parent=55 // pred_check
          %p434 = pneg %p141
        $region66: #{tpu_custom_call.1} parent=55 // pred_check_branch
          %436 = sbr.rel (%p434) target = $region68
        $region67: #{tpu_custom_call.1} parent=55 // pred_region
          %438 = dma.done [#allocation14], 256
        $region68: #{tpu_custom_call.1} parent=55 // pred_fallthru
          _
        // Predicated region
        $region69: #{tpu_custom_call.1} parent=55 // pred_check
          %p439 = pneg %p162
        $region70: #{tpu_custom_call.1} parent=55 // pred_check_branch
          %441 = sbr.rel (%p439) target = $region72
        $region71: #{tpu_custom_call.1} parent=55 // pred_region
          %443 = dma.done [#allocation17], 256
        $region72: #{tpu_custom_call.1} parent=55 // pred_fallthru
          _
        // Predicated region
        $region73: #{tpu_custom_call.1} parent=55 // pred_check
          %p444 = pneg %p204
        $region74: #{tpu_custom_call.1} parent=55 // pred_check_branch
          %446 = sbr.rel (%p444) target = $region76
        $region75: #{tpu_custom_call.1} parent=55 // pred_region
          %448 = dma.done [#allocation17], 256
        $region76: #{tpu_custom_call.1} parent=55 // pred_fallthru
          _
        // Predicated region
        $region77: #{tpu_custom_call.1} parent=55 // pred_check
          %p449 = pneg %p225
        $region78: #{tpu_custom_call.1} parent=55 // pred_check_branch
          %451 = sbr.rel (%p449) target = $region80
        $region79: #{tpu_custom_call.1} parent=55 // pred_region
          %453 = dma.done [#allocation20], 256
        $region80: #{tpu_custom_call.1} parent=55 // pred_fallthru
          _
        %s454 = sand.u32 %s51, 1
        %s455 = scalar_lea.sflag [#allocation11], %s454
        %s456 = sand.u32 %s51, 1
        %s457 = smul.addr %s456, 16
        %s458 = scalar_lea.vmem [#allocation10], %s457
        %p459 = pneg %p64
        %p460 = pneg %p61
        %s461 = sand.u32 %s29, 1
        %s462 = scalar_lea.sflag [#allocation14], %s461
        %s463 = sand.u32 %s81, 1
        %s464 = smul.addr %s463, 16
        %s465 = scalar_lea.vmem [#allocation13], %s464
        %p466 = pneg %p94
        %p467 = pneg %p91
        %p468 = scmp.lt.s32.totalorder %s33, 0
        %s469 = scalar_select %p468, %s33, 0
        %s470 = smul.addr %s469, 8
        %s471 = scalar_lea.vmem %s2, %s470
        %p472 = pneg %p120
        %p473 = pneg %p117
        %p474 = pneg %p141
        %p475 = pneg %p138
        %p476 = pneg %p162
        %p477 = pneg %p159
        %p478 = pneg %p183
        %p479 = pneg %p180
        %p480 = pneg %p204
        %p481 = pneg %p201
        %p482 = pneg %p225
        %p483 = pneg %p222
        %p484 = pneg %p246
        %p485 = pneg %p243
        %p486 = pneg %p272
        %p487 = pneg %p269
        %s488 = smul.u32 4, %s34
        %s489 = ssub.s32 2, %s34
        %s490 = smul.u32 4, %s489
        %p491 = scmp.lt.s32.totalorder %s33, 0
        %s492 = scalar_select %p491, %s33, 0
        %s493 = smul.addr %s492, 8
        %s494 = scalar_lea.vmem %s2, %s493
        %p496 = scmp.eq.s32.totalorder %s34, 0
        // Predicated region
        $region81: #{tpu_custom_call.1} parent=55 // pred_check
          %p497 = pneg %p496
        $region82: #{tpu_custom_call.1} parent=55 // pred_check_branch
          %499 = sbr.rel (%p497) target = $region84
        $region83: #{tpu_custom_call.1} parent=55 // pred_region
          %vm500 = vcmask 261120
          %501 = vst.msk [vmem:[#allocation4] sm:$0xff] %vm500, 0.0
          %502 = vst.msk [vmem:[#allocation5] sm:$0xff] %vm500, 0.0
          %503 = vst.msk [vmem:[#allocation6] sm:$0xff] %vm500, 0.0
          %504 = vst.msk [vmem:[#allocation7] sm:$0xff] %vm500, 0.0
          %505 = vst.msk [vmem:[#allocation8] sm:$0xff] %vm500, 0.0
          %506 = vst.msk [vmem:[#allocation9] sm:$0xff] %vm500, 0.0
        $region84: #{tpu_custom_call.1} parent=55 // pred_fallthru
          _
        %v507 = vld [vmem:[%s418] sm:$0xf]
        %v508 = vld [vmem:[%s418 + $0x4] sm:$0xf]
        %v509 = vld [vmem:[%s418 + $0x8] sm:$0xf]
        %v510 = vld [vmem:[%s418 + $0xc] sm:$0xf]
        %v511 = vld [vmem:[%s428] sm:$0xf]
        %v512 = vld [vmem:[%s428 + $0x4] sm:$0xf]
        %v513 = vld [vmem:[%s428 + $0x8] sm:$0xf]
        %v514 = vld [vmem:[%s428 + $0xc] sm:$0xf]
        %v515 = vld [vmem:[#allocation15] sm:$0xf]
        %v516 = vld [vmem:[#allocation15 + $0x4] sm:$0xf]
        %v517 = vld [vmem:[#allocation15 + $0x8] sm:$0xf]
        %v518 = vld [vmem:[#allocation15 + $0xc] sm:$0xf]
        %v519 = vld [vmem:[%s5] sm:$0x1]
        %v521 = vperm.slane %v519, 0
        %v527 = vunpack.c.l.b16 %v507
        %v528 = vunpack.c.l.b16 %v508
        %v529 = vunpack.c.l.b16 %v509
        %v530 = vunpack.c.l.b16 %v510
        %v531 = vpack.c.b16 %v528, %v527
        %v532 = vpack.c.b16 %v530, %v529
        %v537 = vunpack.c.l.b16 %v515
        %v538 = vunpack.c.l.b16 %v516
        %v539 = vunpack.c.l.b16 %v517
        %v540 = vunpack.c.l.b16 %v518
        %v541 = vpack.c.b16 %v538, %v537
        %v542 = vpack.c.b16 %v540, %v539
        %vm545 = vcmask 261120
        %v547 = vsel %vm545, %v531, 0
        %v550 = vsel %vm545, %v532, 0
        %552 = vmatpush.bf16.msra.mxu0 0
        %553 = vmatpush.bf16.msra.mxu0 0
        %554 = vmatpush.bf16.msra.mxu0 0
        %555 = vmatpush.bf16.msra.mxu0 0
        %556 = vmatpush.bf16.msra.mxu0 0
        %557 = vmatpush.bf16.msra.mxu0 0
        %558 = vmatpush.bf16.msra.mxu0 %v542
        %559 = vmatpush.bf16.msra.mxu0 %v541
        %560 = vmatmul.bf16.gmra.mxu0 %v547
        %v561 = vpop.f32.mrf.mxu0
        %v562 = vadd.f32 %v521, %v561
        %v563 = vpop.f32.mrf.mxu0
        %v564 = vadd.f32 %v521, %v563
        %565 = vmatmul.bf16.gmra.mxu0 %v550
        %v566 = vpop.f32.mrf.mxu0
        %v567 = vadd.f32 %v521, %v566
        %v568 = vpop.f32.mrf.mxu0
        %v569 = vadd.f32 %v521, %v568
        %570 = vdwg.mxu0
        %v571 = vld [vmem:[#allocation18] sm:$0xf]
        %v572 = vld [vmem:[#allocation18 + $0x4] sm:$0xf]
        %v573 = vld [vmem:[#allocation18 + $0x8] sm:$0xf]
        %v574 = vld [vmem:[#allocation18 + $0xc] sm:$0xf]
        %v575 = vld [vmem:[%s8] sm:$0x1]
        %v577 = vperm.slane %v575, 0
        %v583 = vunpack.c.l.b16 %v511
        %v584 = vunpack.c.l.b16 %v512
        %v585 = vunpack.c.l.b16 %v513
        %v586 = vunpack.c.l.b16 %v514
        %v587 = vpack.c.b16 %v584, %v583
        %v588 = vpack.c.b16 %v586, %v585
        %v593 = vunpack.c.l.b16 %v571
        %v594 = vunpack.c.l.b16 %v572
        %v595 = vunpack.c.l.b16 %v573
        %v596 = vunpack.c.l.b16 %v574
        %v597 = vpack.c.b16 %v594, %v593
        %v598 = vpack.c.b16 %v596, %v595
        %v602 = vsel %vm545, %v587, 0
        %v605 = vsel %vm545, %v588, 0
        %607 = vmatpush.bf16.msra.mxu0 0
        %608 = vmatpush.bf16.msra.mxu0 0
        %609 = vmatpush.bf16.msra.mxu0 0
        %610 = vmatpush.bf16.msra.mxu0 0
        %611 = vmatpush.bf16.msra.mxu0 0
        %612 = vmatpush.bf16.msra.mxu0 0
        %613 = vmatpush.bf16.msra.mxu0 %v598
        %614 = vmatpush.bf16.msra.mxu0 %v597
        %615 = vmatmul.bf16.gmra.mxu0 %v602
        %v616 = vpop.f32.mrf.mxu0
        %v617 = vadd.f32 %v577, %v616
        %v618 = vpop.f32.mrf.mxu0
        %v619 = vadd.f32 %v577, %v618
        %620 = vmatmul.bf16.gmra.mxu0 %v605
        %v621 = vpop.f32.mrf.mxu0
        %v622 = vadd.f32 %v577, %v621
        %v623 = vpop.f32.mrf.mxu0
        %v624 = vadd.f32 %v577, %v623
        %625 = vdwg.mxu0
        %626 = vst [vmem:[#allocation2] sm:$0xff] %v562
        %627 = vst [vmem:[#allocation2 + $0x8] sm:$0xff] %v564
        %628 = vst [vmem:[#allocation2 + $0x10] sm:$0xff] %v567
        %629 = vst [vmem:[#allocation2 + $0x18] sm:$0xff] %v569
        %630 = vst [vmem:[#allocation3] sm:$0xff] %v617
        %631 = vst [vmem:[#allocation3 + $0x8] sm:$0xff] %v619
        %632 = vst [vmem:[#allocation3 + $0x10] sm:$0xff] %v622
        %633 = vst [vmem:[#allocation3 + $0x18] sm:$0xff] %v624
        %v634 = vld [vmem:[%s494] sm:$0xff]
        %v635 = vld [vmem:[#allocation4] sm:$0xff]
        %v636 = vld [vmem:[#allocation5] sm:$0xff]
        %v637 = vld [vmem:[#allocation6] sm:$0xff]
        %v638 = vld [vmem:[#allocation7] sm:$0xff]
        %v639 = vld [vmem:[#allocation8] sm:$0xff]
        %v640 = vld [vmem:[#allocation9] sm:$0xff]
        %v641 = vld [vmem:[#allocation2] sm:$0xff]
        %v642 = vpack.c.bf16 %v635, %v635
        %v643 = vld [vmem:[#allocation16] sm:$0xf]
        %v644 = vld [vmem:[#allocation16 + $0x4] sm:$0xf]
        %v645 = vld [vmem:[#allocation16 + $0x8] sm:$0xf]
        %v646 = vld [vmem:[#allocation16 + $0xc] sm:$0xf]
        %v651 = vunpack.c.l.b16 %v643
        %v652 = vunpack.c.l.b16 %v644
        %v653 = vunpack.c.l.b16 %v645
        %v654 = vunpack.c.l.b16 %v646
        %v655 = vpack.c.b16 %v652, %v651
        %v656 = vpack.c.b16 %v654, %v653
        %v660 = vsel %vm545, %v642, 0
        %662 = vmatpush.bf16.msra.mxu0 0
        %663 = vmatpush.bf16.msra.mxu0 0
        %664 = vmatpush.bf16.msra.mxu0 0
        %665 = vmatpush.bf16.msra.mxu0 0
        %666 = vmatpush.bf16.msra.mxu0 0
        %667 = vmatpush.bf16.msra.mxu0 0
        %668 = vmatpush.bf16.msra.mxu0 %v656
        %669 = vmatpush.bf16.msra.mxu0 %v655
        %670 = vmatmul.bf16.gmra.mxu0 %v660
        %v671 = vpop.f32.mrf.mxu0
        %v672 = vadd.f32 0.0, %v671
        %v673 = vpop.f32.mrf.mxu0
        %674 = vdwg.mxu0
        %v675 = vadd.f32 %v641, %v672
        %v676 = vmul.f32 %v675, 0.5
        %v677 = vtanh.pop %v676
        %v678 = vmul.f32 %v677, 0.5
        %v679 = vadd.f32 %v678, 0.5
        %v680 = vtanh.pop %v675
        %682 = vrot.lane.b32.xlu0 %v636, 32
        %v683 = vpop.permute.xlu0 %682
        %v685 = vmul.f32 %v679, %v683
        %687 = vrot.lane.b32.xlu0 %v680, 64
        %v688 = vpop.permute.xlu0 %687
        %v690 = vmul.f32 %v679, %v688
        %692 = vrot.lane.b32.xlu0 %v690, 32
        %v693 = vpop.permute.xlu0 %692
        %v695 = vadd.f32 %v685, %v693
        %v696 = vtanh.pop %v695
        %698 = vrot.lane.b32.xlu0 %v696, 64
        %v699 = vpop.permute.xlu0 %698
        %v701 = vmul.f32 %v679, %v699
        %s702 = smul.u32 %s34, 4
        %s703 = scvt.s32.f32 %s702
        %v704 = vstv %s703
        %vm705 = vcmp.gt.f32.partialorder %v634, %v704
        %v706 = vsel %vm705, 1, 0
        %707 = vset.pattern.permute.xlu0 0
        %708 = vperm.xlu0 %707, %v706
        %v709 = vpop.permute.xlu0 %708
        %vm710 = vcmp.eq.s32.totalorder %v709, 1
        %v711 = vsel %vm710, %v701, 0.0
        %713 = vrot.lane.b32.xlu0 %v711, 32
        %v714 = vpop.permute.xlu0 %713
        %v716 = vadd.f32 %v639, %v714
        %s717 = scalar_lea.vmem [#allocation3], 24
        %v718 = vld [vmem:[%s717] sm:$0xff]
        %v719 = vpack.c.bf16 %v637, %v637
        %v720 = vld [vmem:[#allocation19] sm:$0xf]
        %v721 = vld [vmem:[#allocation19 + $0x4] sm:$0xf]
        %v722 = vld [vmem:[#allocation19 + $0x8] sm:$0xf]
        %v723 = vld [vmem:[#allocation19 + $0xc] sm:$0xf]
        %v728 = vunpack.c.l.b16 %v720
        %v729 = vunpack.c.l.b16 %v721
        %v730 = vunpack.c.l.b16 %v722
        %v731 = vunpack.c.l.b16 %v723
        %v732 = vpack.c.b16 %v729, %v728
        %v733 = vpack.c.b16 %v731, %v730
        %v737 = vsel %vm545, %v719, 0
        %739 = vmatpush.bf16.msra.mxu0 0
        %740 = vmatpush.bf16.msra.mxu0 0
        %741 = vmatpush.bf16.msra.mxu0 0
        %742 = vmatpush.bf16.msra.mxu0 0
        %743 = vmatpush.bf16.msra.mxu0 0
        %744 = vmatpush.bf16.msra.mxu0 0
        %745 = vmatpush.bf16.msra.mxu0 %v733
        %746 = vmatpush.bf16.msra.mxu0 %v732
        %747 = vmatmul.bf16.gmra.mxu0 %v737
        %v748 = vpop.f32.mrf.mxu0
        %v749 = vadd.f32 0.0, %v748
        %v750 = vpop.f32.mrf.mxu0
        %751 = vdwg.mxu0
        %v752 = vadd.f32 %v718, %v749
        %v753 = vmul.f32 %v752, 0.5
        %v754 = vtanh.pop %v753
        %v755 = vmul.f32 %v754, 0.5
        %v756 = vadd.f32 %v755, 0.5
        %v757 = vtanh.pop %v752
        %759 = vrot.lane.b32.xlu0 %v638, 32
        %v760 = vpop.permute.xlu0 %759
        %v762 = vmul.f32 %v756, %v760
        %764 = vrot.lane.b32.xlu0 %v757, 64
        %v765 = vpop.permute.xlu0 %764
        %v767 = vmul.f32 %v756, %v765
        %769 = vrot.lane.b32.xlu0 %v767, 32
        %v770 = vpop.permute.xlu0 %769
        %v772 = vadd.f32 %v762, %v770
        %v773 = vtanh.pop %v772
        %775 = vrot.lane.b32.xlu0 %v773, 64
        %v776 = vpop.permute.xlu0 %775
        %v778 = vmul.f32 %v756, %v776
        %s779 = ssub.s32 2, %s34
        %s780 = smul.u32 %s779, 4
        %s781 = sadd.s32 %s780, 3
        %p782 = scmp.lt.s32.totalorder %s781, 9
        %s783 = scalar_select %p782, 1, 0
        %v784 = vstv %s783
        %vm785 = vcmp.eq.s32.totalorder %v784, 1
        %787 = vrot.lane.b32.xlu0 %v637, 96
        %v788 = vpop.permute.xlu0 %787
        %v790 = vsel %vm785, %v778, %v788
        %v791 = vsel %vm785, %v772, %v760
        %s792 = scvt.s32.f32 %s781
        %v793 = vstv %s792
        %vm794 = vcmp.gt.f32.partialorder %v634, %v793
        %v795 = vsel %vm794, 1, 0
        %796 = vset.pattern.permute.xlu0 0
        %797 = vperm.xlu0 %796, %v795
        %v798 = vpop.permute.xlu0 %797
        %vm799 = vcmp.eq.s32.totalorder %v798, 1
        %v800 = vsel %vm799, %v790, 0.0
        %802 = vrot.lane.b32.xlu0 %v800, 32
        %v803 = vpop.permute.xlu0 %802
        %v805 = vadd.f32 %v640, %v803
        %s806 = scalar_lea.vmem [#allocation2], 8
        %v807 = vld [vmem:[%s806] sm:$0xff]
        %v808 = vpack.c.bf16 %v701, %v701
        %810 = vrot.lane.b32.xlu0 %v808, 32
        %v811 = vpop.permute.xlu0 %810
        %v813 = vsel %vm545, %v811, 0
        %815 = vmatpush.bf16.msra.mxu0 0
        %816 = vmatpush.bf16.msra.mxu0 0
        %817 = vmatpush.bf16.msra.mxu0 0
        %818 = vmatpush.bf16.msra.mxu0 0
        %819 = vmatpush.bf16.msra.mxu0 0
        %820 = vmatpush.bf16.msra.mxu0 0
        %821 = vmatpush.bf16.msra.mxu0 %v656
        %822 = vmatpush.bf16.msra.mxu0 %v655
        %823 = vmatmul.bf16.gmra.mxu0 %v813
        %v824 = vpop.f32.mrf.mxu0
        %v825 = vadd.f32 0.0, %v824
        %v826 = vpop.f32.mrf.mxu0
        %827 = vdwg.mxu0
        %v828 = vadd.f32 %v807, %v825
        %v829 = vmul.f32 %v828, 0.5
        %v830 = vtanh.pop %v829
        %v831 = vmul.f32 %v830, 0.5
        %v832 = vadd.f32 %v831, 0.5
        %v833 = vtanh.pop %v828
        %v834 = vmul.f32 %v832, %v695
        %836 = vrot.lane.b32.xlu0 %v833, 64
        %v837 = vpop.permute.xlu0 %836
        %v839 = vmul.f32 %v832, %v837
        %841 = vrot.lane.b32.xlu0 %v839, 32
        %v842 = vpop.permute.xlu0 %841
        %v844 = vadd.f32 %v834, %v842
        %v845 = vtanh.pop %v844
        %847 = vrot.lane.b32.xlu0 %v845, 64
        %v848 = vpop.permute.xlu0 %847
        %v850 = vmul.f32 %v832, %v848
        %s851 = sadd.s32 %s702, 1
        %s852 = scvt.s32.f32 %s851
        %v853 = vstv %s852
        %vm854 = vcmp.gt.f32.partialorder %v634, %v853
        %v855 = vsel %vm854, 1, 0
        %856 = vset.pattern.permute.xlu0 0
        %857 = vperm.xlu0 %856, %v855
        %v858 = vpop.permute.xlu0 %857
        %vm859 = vcmp.eq.s32.totalorder %v858, 1
        %v860 = vsel %vm859, %v850, 0.0
        %862 = vrot.lane.b32.xlu0 %v860, 32
        %v863 = vpop.permute.xlu0 %862
        %v865 = vadd.f32 %v716, %v863
        %s866 = scalar_lea.vmem [#allocation3], 16
        %v867 = vld [vmem:[%s866] sm:$0xff]
        %v868 = vpack.c.bf16 %v790, %v790
        %870 = vrot.lane.b32.xlu0 %v868, 32
        %v871 = vpop.permute.xlu0 %870
        %v873 = vsel %vm545, %v871, 0
        %875 = vmatpush.bf16.msra.mxu0 0
        %876 = vmatpush.bf16.msra.mxu0 0
        %877 = vmatpush.bf16.msra.mxu0 0
        %878 = vmatpush.bf16.msra.mxu0 0
        %879 = vmatpush.bf16.msra.mxu0 0
        %880 = vmatpush.bf16.msra.mxu0 0
        %881 = vmatpush.bf16.msra.mxu0 %v733
        %882 = vmatpush.bf16.msra.mxu0 %v732
        %883 = vmatmul.bf16.gmra.mxu0 %v873
        %v884 = vpop.f32.mrf.mxu0
        %v885 = vadd.f32 0.0, %v884
        %v886 = vpop.f32.mrf.mxu0
        %887 = vdwg.mxu0
        %v888 = vadd.f32 %v867, %v885
        %v889 = vmul.f32 %v888, 0.5
        %v890 = vtanh.pop %v889
        %v891 = vmul.f32 %v890, 0.5
        %v892 = vadd.f32 %v891, 0.5
        %v893 = vtanh.pop %v888
        %v894 = vmul.f32 %v892, %v791
        %896 = vrot.lane.b32.xlu0 %v893, 64
        %v897 = vpop.permute.xlu0 %896
        %v899 = vmul.f32 %v892, %v897
        %901 = vrot.lane.b32.xlu0 %v899, 32
        %v902 = vpop.permute.xlu0 %901
        %v904 = vadd.f32 %v894, %v902
        %v905 = vtanh.pop %v904
        %907 = vrot.lane.b32.xlu0 %v905, 64
        %v908 = vpop.permute.xlu0 %907
        %v910 = vmul.f32 %v892, %v908
        %s911 = sadd.s32 %s780, 2
        %p912 = scmp.lt.s32.totalorder %s911, 9
        %s913 = scalar_select %p912, 1, 0
        %v914 = vstv %s913
        %vm915 = vcmp.eq.s32.totalorder %v914, 1
        %v916 = vsel %vm915, %v910, %v790
        %v917 = vsel %vm915, %v904, %v791
        %s918 = scvt.s32.f32 %s911
        %v919 = vstv %s918
        %vm920 = vcmp.gt.f32.partialorder %v634, %v919
        %v921 = vsel %vm920, 1, 0
        %922 = vset.pattern.permute.xlu0 0
        %923 = vperm.xlu0 %922, %v921
        %v924 = vpop.permute.xlu0 %923
        %vm925 = vcmp.eq.s32.totalorder %v924, 1
        %v926 = vsel %vm925, %v916, 0.0
        %928 = vrot.lane.b32.xlu0 %v926, 32
        %v929 = vpop.permute.xlu0 %928
        %v931 = vadd.f32 %v805, %v929
        %s932 = scalar_lea.vmem [#allocation2], 16
        %v933 = vld [vmem:[%s932] sm:$0xff]
        %v934 = vpack.c.bf16 %v850, %v850
        %936 = vrot.lane.b32.xlu0 %v934, 32
        %v937 = vpop.permute.xlu0 %936
        %v939 = vsel %vm545, %v937, 0
        %941 = vmatpush.bf16.msra.mxu0 0
        %942 = vmatpush.bf16.msra.mxu0 0
        %943 = vmatpush.bf16.msra.mxu0 0
        %944 = vmatpush.bf16.msra.mxu0 0
        %945 = vmatpush.bf16.msra.mxu0 0
        %946 = vmatpush.bf16.msra.mxu0 0
        %947 = vmatpush.bf16.msra.mxu0 %v656
        %948 = vmatpush.bf16.msra.mxu0 %v655
        %949 = vmatmul.bf16.gmra.mxu0 %v939
        %v950 = vpop.f32.mrf.mxu0
        %v951 = vadd.f32 0.0, %v950
        %v952 = vpop.f32.mrf.mxu0
        %953 = vdwg.mxu0
        %v954 = vadd.f32 %v933, %v951
        %v955 = vmul.f32 %v954, 0.5
        %v956 = vtanh.pop %v955
        %v957 = vmul.f32 %v956, 0.5
        %v958 = vadd.f32 %v957, 0.5
        %v959 = vtanh.pop %v954
        %v960 = vmul.f32 %v958, %v844
        %962 = vrot.lane.b32.xlu0 %v959, 64
        %v963 = vpop.permute.xlu0 %962
        %v965 = vmul.f32 %v958, %v963
        %967 = vrot.lane.b32.xlu0 %v965, 32
        %v968 = vpop.permute.xlu0 %967
        %v970 = vadd.f32 %v960, %v968
        %v971 = vtanh.pop %v970
        %973 = vrot.lane.b32.xlu0 %v971, 64
        %v974 = vpop.permute.xlu0 %973
        %v976 = vmul.f32 %v958, %v974
        %s977 = sadd.s32 %s702, 2
        %s978 = scvt.s32.f32 %s977
        %v979 = vstv %s978
        %vm980 = vcmp.gt.f32.partialorder %v634, %v979
        %v981 = vsel %vm980, 1, 0
        %982 = vset.pattern.permute.xlu0 0
        %983 = vperm.xlu0 %982, %v981
        %v984 = vpop.permute.xlu0 %983
        %vm985 = vcmp.eq.s32.totalorder %v984, 1
        %v986 = vsel %vm985, %v976, 0.0
        %988 = vrot.lane.b32.xlu0 %v986, 32
        %v989 = vpop.permute.xlu0 %988
        %v991 = vadd.f32 %v865, %v989
        %s992 = scalar_lea.vmem [#allocation3], 8
        %v993 = vld [vmem:[%s992] sm:$0xff]
        %v994 = vpack.c.bf16 %v916, %v916
        %996 = vrot.lane.b32.xlu0 %v994, 32
        %v997 = vpop.permute.xlu0 %996
        %v999 = vsel %vm545, %v997, 0
        %1001 = vmatpush.bf16.msra.mxu0 0
        %1002 = vmatpush.bf16.msra.mxu0 0
        %1003 = vmatpush.bf16.msra.mxu0 0
        %1004 = vmatpush.bf16.msra.mxu0 0
        %1005 = vmatpush.bf16.msra.mxu0 0
        %1006 = vmatpush.bf16.msra.mxu0 0
        %1007 = vmatpush.bf16.msra.mxu0 %v733
        %1008 = vmatpush.bf16.msra.mxu0 %v732
        %1009 = vmatmul.bf16.gmra.mxu0 %v999
        %v1010 = vpop.f32.mrf.mxu0
        %v1011 = vadd.f32 0.0, %v1010
        %v1012 = vpop.f32.mrf.mxu0
        %1013 = vdwg.mxu0
        %v1014 = vadd.f32 %v993, %v1011
        %v1015 = vmul.f32 %v1014, 0.5
        %v1016 = vtanh.pop %v1015
        %v1017 = vmul.f32 %v1016, 0.5
        %v1018 = vadd.f32 %v1017, 0.5
        %v1019 = vtanh.pop %v1014
        %v1020 = vmul.f32 %v1018, %v917
        %1022 = vrot.lane.b32.xlu0 %v1019, 64
        %v1023 = vpop.permute.xlu0 %1022
        %v1025 = vmul.f32 %v1018, %v1023
        %1027 = vrot.lane.b32.xlu0 %v1025, 32
        %v1028 = vpop.permute.xlu0 %1027
        %v1030 = vadd.f32 %v1020, %v1028
        %v1031 = vtanh.pop %v1030
        %1033 = vrot.lane.b32.xlu0 %v1031, 64
        %v1034 = vpop.permute.xlu0 %1033
        %v1036 = vmul.f32 %v1018, %v1034
        %s1037 = sadd.s32 %s780, 1
        %p1038 = scmp.lt.s32.totalorder %s1037, 9
        %s1039 = scalar_select %p1038, 1, 0
        %v1040 = vstv %s1039
        %vm1041 = vcmp.eq.s32.totalorder %v1040, 1
        %v1042 = vsel %vm1041, %v1036, %v916
        %v1043 = vsel %vm1041, %v1030, %v917
        %s1044 = scvt.s32.f32 %s1037
        %v1045 = vstv %s1044
        %vm1046 = vcmp.gt.f32.partialorder %v634, %v1045
        %v1047 = vsel %vm1046, 1, 0
        %1048 = vset.pattern.permute.xlu0 0
        %1049 = vperm.xlu0 %1048, %v1047
        %v1050 = vpop.permute.xlu0 %1049
        %vm1051 = vcmp.eq.s32.totalorder %v1050, 1
        %v1052 = vsel %vm1051, %v1042, 0.0
        %1054 = vrot.lane.b32.xlu0 %v1052, 32
        %v1055 = vpop.permute.xlu0 %1054
        %v1057 = vadd.f32 %v931, %v1055
        %s1058 = scalar_lea.vmem [#allocation2], 24
        %v1059 = vld [vmem:[%s1058] sm:$0xff]
        %v1060 = vpack.c.bf16 %v976, %v976
        %1062 = vrot.lane.b32.xlu0 %v1060, 32
        %v1063 = vpop.permute.xlu0 %1062
        %v1065 = vsel %vm545, %v1063, 0
        %1067 = vmatpush.bf16.msra.mxu0 0
        %1068 = vmatpush.bf16.msra.mxu0 0
        %1069 = vmatpush.bf16.msra.mxu0 0
        %1070 = vmatpush.bf16.msra.mxu0 0
        %1071 = vmatpush.bf16.msra.mxu0 0
        %1072 = vmatpush.bf16.msra.mxu0 0
        %1073 = vmatpush.bf16.msra.mxu0 %v656
        %1074 = vmatpush.bf16.msra.mxu0 %v655
        %1075 = vmatmul.bf16.gmra.mxu0 %v1065
        %v1076 = vpop.f32.mrf.mxu0
        %v1077 = vadd.f32 0.0, %v1076
        %v1078 = vpop.f32.mrf.mxu0
        %1079 = vdwg.mxu0
        %v1080 = vadd.f32 %v1059, %v1077
        %v1081 = vmul.f32 %v1080, 0.5
        %v1082 = vtanh.pop %v1081
        %v1083 = vmul.f32 %v1082, 0.5
        %v1084 = vadd.f32 %v1083, 0.5
        %v1085 = vtanh.pop %v1080
        %v1086 = vmul.f32 %v1084, %v970
        %1088 = vrot.lane.b32.xlu0 %v1085, 64
        %v1089 = vpop.permute.xlu0 %1088
        %v1091 = vmul.f32 %v1084, %v1089
        %1093 = vrot.lane.b32.xlu0 %v1091, 32
        %v1094 = vpop.permute.xlu0 %1093
        %v1096 = vadd.f32 %v1086, %v1094
        %v1097 = vtanh.pop %v1096
        %1099 = vrot.lane.b32.xlu0 %v1097, 64
        %v1100 = vpop.permute.xlu0 %1099
        %v1102 = vmul.f32 %v1084, %v1100
        %s1103 = sadd.s32 %s702, 3
        %s1104 = scvt.s32.f32 %s1103
        %v1105 = vstv %s1104
        %vm1106 = vcmp.gt.f32.partialorder %v634, %v1105
        %v1107 = vsel %vm1106, 1, 0
        %1108 = vset.pattern.permute.xlu0 0
        %1109 = vperm.xlu0 %1108, %v1107
        %v1110 = vpop.permute.xlu0 %1109
        %vm1111 = vcmp.eq.s32.totalorder %v1110, 1
        %v1112 = vsel %vm1111, %v1102, 0.0
        %1114 = vrot.lane.b32.xlu0 %v1112, 32
        %v1115 = vpop.permute.xlu0 %1114
        %v1117 = vadd.f32 %v991, %v1115
        %v1118 = vld [vmem:[#allocation3] sm:$0xff]
        %v1119 = vpack.c.bf16 %v1042, %v1042
        %1121 = vrot.lane.b32.xlu0 %v1119, 32
        %v1122 = vpop.permute.xlu0 %1121
        %v1124 = vsel %vm545, %v1122, 0
        %1126 = vmatpush.bf16.msra.mxu0 0
        %1127 = vmatpush.bf16.msra.mxu0 0
        %1128 = vmatpush.bf16.msra.mxu0 0
        %1129 = vmatpush.bf16.msra.mxu0 0
        %1130 = vmatpush.bf16.msra.mxu0 0
        %1131 = vmatpush.bf16.msra.mxu0 0
        %1132 = vmatpush.bf16.msra.mxu0 %v733
        %1133 = vmatpush.bf16.msra.mxu0 %v732
        %1134 = vmatmul.bf16.gmra.mxu0 %v1124
        %v1135 = vpop.f32.mrf.mxu0
        %v1136 = vadd.f32 0.0, %v1135
        %v1137 = vpop.f32.mrf.mxu0
        %1138 = vdwg.mxu0
        %v1139 = vadd.f32 %v1118, %v1136
        %v1140 = vmul.f32 %v1139, 0.5
        %v1141 = vtanh.pop %v1140
        %v1142 = vmul.f32 %v1141, 0.5
        %v1143 = vadd.f32 %v1142, 0.5
        %v1144 = vtanh.pop %v1139
        %v1145 = vmul.f32 %v1143, %v1043
        %1147 = vrot.lane.b32.xlu0 %v1144, 64
        %v1148 = vpop.permute.xlu0 %1147
        %v1150 = vmul.f32 %v1143, %v1148
        %1152 = vrot.lane.b32.xlu0 %v1150, 32
        %v1153 = vpop.permute.xlu0 %1152
        %v1155 = vadd.f32 %v1145, %v1153
        %v1156 = vtanh.pop %v1155
        %1158 = vrot.lane.b32.xlu0 %v1156, 64
        %v1159 = vpop.permute.xlu0 %1158
        %v1161 = vmul.f32 %v1143, %v1159
        %p1162 = scmp.lt.s32.totalorder %s780, 9
        %s1163 = scalar_select %p1162, 1, 0
        %v1164 = vstv %s1163
        %vm1165 = vcmp.eq.s32.totalorder %v1164, 1
        %v1166 = vsel %vm1165, %v1161, %v1042
        %v1167 = vsel %vm1165, %v1155, %v1043
        %s1168 = scvt.s32.f32 %s780
        %v1169 = vstv %s1168
        %vm1170 = vcmp.gt.f32.partialorder %v634, %v1169
        %v1171 = vsel %vm1170, 1, 0
        %1172 = vset.pattern.permute.xlu0 0
        %1173 = vperm.xlu0 %1172, %v1171
        %v1174 = vpop.permute.xlu0 %1173
        %vm1175 = vcmp.eq.s32.totalorder %v1174, 1
        %v1176 = vsel %vm1175, %v1166, 0.0
        %1178 = vrot.lane.b32.xlu0 %v1176, 32
        %v1179 = vpop.permute.xlu0 %1178
        %v1181 = vadd.f32 %v1057, %v1179
        %1183 = vrot.lane.b32.xlu0 %v1102, 32
        %v1184 = vpop.permute.xlu0 %1183
        %1186 = vst.msk [vmem:[#allocation4] sm:$0xff] %vm545, %v1184
        %1188 = vrot.lane.b32.xlu0 %v1096, 96
        %v1189 = vpop.permute.xlu0 %1188
        %1191 = vst.msk [vmem:[#allocation5] sm:$0xff] %vm545, %v1189
        %1193 = vrot.lane.b32.xlu0 %v1166, 32
        %v1194 = vpop.permute.xlu0 %1193
        %1196 = vst.msk [vmem:[#allocation6] sm:$0xff] %vm545, %v1194
        %1198 = vrot.lane.b32.xlu0 %v1167, 96
        %v1199 = vpop.permute.xlu0 %1198
        %1201 = vst.msk [vmem:[#allocation7] sm:$0xff] %vm545, %v1199
        %1202 = vst.msk [vmem:[#allocation8] sm:$0xff] %vm545, %v1117
        %1203 = vst.msk [vmem:[#allocation9] sm:$0xff] %vm545, %v1181
        %p1204 = scmp.eq.s32.totalorder %s34, 2
        // Predicated region
        $region85: #{tpu_custom_call.1} parent=55 // pred_check
          %p1205 = pneg %p1204
        $region86: #{tpu_custom_call.1} parent=55 // pred_check_branch
          %1207 = sbr.rel (%p1205) target = $region88
        $region87: #{tpu_custom_call.1} parent=55 // pred_region
          %v1208 = vmax.f32 %v634, 1.0
          %1210 = vset.pattern.permute.xlu0 0
          %1211 = vperm.xlu0 %1210, %v1208
          %v1212 = vpop.permute.xlu0 %1211
          %v1214 = vrcp.pop %v1212
          %v1215 = vmul.f32 %v1212, %v1214
          %v1216 = vsub.f32 1.0, %v1215
          %v1217 = vmul.f32 %v1214, %v1216
          %v1218 = vadd.f32 %v1214, %v1217
          %vm1219 = vweird.f32 %v1212
          %vm1220 = vweird.f32 %v1214
          %vm1221 = vmor %vm1219, %vm1220
          %v1222 = vsel %vm1221, %v1214, %v1218
          %v1223 = vand.u32 2147483647, %v1212
          %vm1224 = vcmp.eq.f32.partialorder %v1223, 8.507059e+37
          %v1225 = vand.u32 %v1212, 2147483648
          %v1226 = vor.u32 1.1754944e-38, %v1225
          %v1227 = vsel %vm1224, %v1226, %v1222
          %v1228 = vmul.f32 %v1117, %v1227
          %1229 = vst.msk [vmem:[#allocation21] sm:$0xff] %vm545, %v1228
          %v1230 = vmul.f32 %v1181, %v1227
          %1232 = vrot.lane.b32.xlu0 %v1230, 32
          %v1233 = vpop.permute.xlu0 %1232
          %vm1235 = vcmask 523520
          %1236 = vst.msk [vmem:[#allocation21] sm:$0xff] %vm1235, %v1233
        $region88: #{tpu_custom_call.1} parent=55 // pred_fallthru
          _
        // Predicated region
        $region89: #{tpu_custom_call.1} parent=55 // pred_check
          %p1237 = pneg %p269
        $region90: #{tpu_custom_call.1} parent=55 // pred_check_branch
          %1239 = sbr.rel (%p1237) target = $region92
        $region91: #{tpu_custom_call.1} parent=55 // pred_region
          %1241 = vsyncadd [#allocation12], 0
          %s1242 = smul.addr %s33, 8
          %s1243 = scalar_lea.hbm %s9, %s1242
          %s1245 = sshll.u32 [#allocation21], 4
          %s1246 = int_to_ptr.vmem [resolvable:$true] %s1245
          %s1247 = sshll.u32 %s1243, 4
          %s1248 = int_to_ptr.hbm [resolvable:$true] %s1247
          %1250 = dma.vmem_to_hbm [thread:$0]  %s1246, 128, %s1248, [#allocation12]
        $region92: #{tpu_custom_call.1} parent=55 // pred_fallthru
          _
        // Predicated region
        $region93: #{tpu_custom_call.1} parent=55 // pred_check
          %p1251 = pneg %p269
        $region94: #{tpu_custom_call.1} parent=55 // pred_check_branch
          %1253 = sbr.rel (%p1251) target = $region96
        $region95: #{tpu_custom_call.1} parent=55 // pred_region
          %1255 = dma.done [#allocation12], 128
        $region96: #{tpu_custom_call.1} parent=55 // pred_fallthru
          _
      $region56: #{tpu_custom_call.1} parent=5 // pred_fallthru
        _
      %p1256 = scmp.le.s32.totalorder 2, %s24
      // Predicated region
      $region97: #{tpu_custom_call.1} parent=5 // pred_check
        %p1257 = pneg %p1256
      $region98: #{tpu_custom_call.1} parent=5 // pred_check_branch
        %1259 = sbr.rel (%p1257) target = $region100
      $region99: #{tpu_custom_call.1} parent=5 // pred_region
        %s1260 = ssub.s32 %s24, 2
      $region100: #{tpu_custom_call.1} parent=5 // pred_fallthru
        _
    $region6: #{tpu_custom_call.1} parent=1 // loop_footer
      %s28 = sadd.s32 1, %s24
    $region7: #{tpu_custom_call.1} parent=1 // loop_footer_branch
      %23 = sbr.rel target = $region3
    $region8: #{tpu_custom_call.1} parent=1 // loop_exit
      _
    %1261 = vsyncpa [#allocation11], 1
    %s1262 = scalar_lea.sflag [#allocation11], 1
    %1263 = vsyncpa %s1262, 1
    %1264 = vsyncpa [#allocation14], 1
    %s1265 = scalar_lea.sflag [#allocation14], 1
    %1266 = vsyncpa %s1265, 1
    %1267 = vsyncpa [#allocation17], 1
    %1268 = vsyncpa [#allocation20], 1
    %1269 = vsyncpa [#allocation12], 1
    %s1270 = scalar_lea.sflag [#allocation12], 1
    %1271 = vsyncpa %s1270, 1

</llo_original>
